<compile_context>
chip_gen: v7x
topology: tpu7x:2x2x1
jax: 0.10.0
libtpu: 0.0.40
codegen_flags: <defaults>
</compile_context>

<pallas_src>
import math

import jax
import jax.numpy as jnp
from jax.experimental import pallas as pl
from jax.experimental.pallas import tpu as pltpu


def _make_kernel(heads, dim_head, qdim, m_valid, m_pad):
    n_extra = m_pad - m_valid

    def kernel(x_ref, kt_ref, v_ref, wqt_ref, wot_ref, bo_ref, o_ref):
        cdt = x_ref.dtype                     # native compute dtype for MXU operands
        x = x_ref[0]                          # (tn, qdim)
        tn = x.shape[0]

        # Fused full-width Q projection (softmax scale already folded into Wq^T).
        q_all = jnp.dot(x, wqt_ref[...],
                        preferred_element_type=jnp.float32).astype(cdt)   # (tn, inner)

        acc = jnp.zeros((tn, qdim), dtype=jnp.float32)   # f32 output accumulator

        for h in range(heads):                # static unroll over heads
            lo = h * dim_head
            qh = q_all[:, lo:lo + dim_head]   # (tn, dh)   (only remaining lane slice)
            kt_h = kt_ref[0, h]               # (dh, m_pad)  head-major K^T, leading index
            v_h = v_ref[0, h]                 # (m_pad, dh)  head-major V,   leading index

            # scores = q @ k^T  -- no in-kernel transpose, contraction on dim_head
            s = jnp.dot(qh, kt_h, preferred_element_type=jnp.float32)     # (tn, m_pad)
            m = jnp.max(s, axis=-1, keepdims=True)
            p = jnp.exp(s - m)
            l = jnp.sum(p, axis=-1, keepdims=True)
            if n_extra:
                # Zero-padded keys (no K bias) give scores == 0 exactly, so each padded
                # column contributes exp(-m) to the denominator; correct analytically
                # instead of adding a (tn, m_pad) bias per head.
                l = l - float(n_extra) * jnp.exp(-m)

            oh = jnp.dot(p.astype(cdt), v_h,
                         preferred_element_type=jnp.float32)              # (tn, dh)
            oh = oh * pl.reciprocal(l, approx=False)   # exact reciprocal, (tn, 1) -> cheap

            # Per-head output projection, accumulated in f32 — no lane-offset scratch
            # stores and no (tn, inner) scratch round-trip.
            acc = acc + jnp.dot(oh.astype(cdt), wot_ref[h],
                                preferred_element_type=jnp.float32)       # (tn, qdim)

        o_ref[0] = (acc + bo_ref[...].astype(jnp.float32)).astype(o_ref.dtype)

    return kernel


def memory_efficient_cross_attention(x, context, params, *, heads, dim_head,
                                     tile_n=None):
    """x: (B, N, query_dim), context: (B, M, context_dim) -> (B, N, query_dim)."""
    wq, wk, wv, wo, bo = params
    x = jnp.asarray(x)
    context = jnp.asarray(context)
    B, N, qdim = x.shape
    _, M, cdim = context.shape
    inner = heads * dim_head
    assert wq.shape == (inner, qdim)
    assert wk.shape == (inner, cdim)
    assert wv.shape == (inner, cdim)
    assert wo.shape == (qdim, inner)
    assert bo.shape == (qdim,)

    dtype = x.dtype
    scale = 1.0 / math.sqrt(dim_head)
    hp = jax.lax.Precision.HIGHEST

    # ---------- host-side (XLA) preprocessing: layout plumbing + hoisted K/V ----------
    # Scale folded into Wq^T (applied in f32 before casting back to the weight dtype).
    wq_t = (jnp.asarray(wq, jnp.float32).T * scale).astype(dtype)          # (qdim, inner)
    wo_hm = jnp.asarray(wo).T.reshape(heads, dim_head, qdim).astype(dtype)  # (H, dh, qdim)
    bo2 = jnp.asarray(bo).reshape(1, qdim).astype(jnp.float32)

    # K/V projections hoisted out of the kernel: computed once per call instead of once
    # per N-tile (removes 2*m_pad*cdim*inner redundant MXU flops per tile).
    k_all = jnp.einsum('bmc,ic->bmi', context, jnp.asarray(wk), precision=hp).astype(dtype)
    v_all = jnp.einsum('bmc,ic->bmi', context, jnp.asarray(wv), precision=hp).astype(dtype)

    # Pad context length to a lane-dense multiple of 128 with zeros (handled in-kernel by
    # the analytic denominator correction; valid because K/V have no bias).
    m_pad = 128 * pl.cdiv(M, 128)
    if m_pad != M:
        pad = ((0, 0), (0, m_pad - M), (0, 0))
        k_all = jnp.pad(k_all, pad)
        v_all = jnp.pad(v_all, pad)

    # Head-major, matmul-ready layouts (no in-kernel transposes / lane slices for K, V).
    k_hm = k_all.reshape(B, m_pad, heads, dim_head).transpose(0, 2, 3, 1)  # (B,H,dh,m_pad)
    v_hm = v_all.reshape(B, m_pad, heads, dim_head).transpose(0, 2, 1, 3)  # (B,H,m_pad,dh)

    # ---------- generation-aware VMEM budget and tile size ----------
    try:
        info = pltpu.get_tpu_info()
        vmem_cap = int(getattr(info, "vmem_capacity_bytes", 128 * 1024 * 1024))
    except Exception:
        vmem_cap = 128 * 1024 * 1024
    # ~38 MiB scoped on v7x (64 MiB/TC), ~76 MiB on v5e/v6e (128 MiB) — leaves headroom.
    vmem_limit = min(int(vmem_cap * 0.6), 96 * 1024 * 1024)

    itemsize = jnp.dtype(dtype).itemsize
    dh_lane = max(dim_head, 128)   # last-dim lane padding of head-major V in VMEM

    def _tile_bytes(tn):
        fixed = (2 * inner * m_pad * itemsize                # K^T blocks (double buffered)
                 + 2 * heads * m_pad * dh_lane * itemsize    # V blocks (double buffered)
                 + (2 * qdim * inner + qdim) * 4)            # resident weights (upper bound)
        per_tile = (4 * tn * qdim * itemsize                 # x + out blocks (2 buffers each)
                    + tn * inner * (4 + itemsize)            # q_all (f32 + cdt copy)
                    + 2 * tn * m_pad * 4                     # s and p live together
                    + tn * qdim * 4                          # f32 accumulator
                    + tn * dh_lane * 4)                      # per-head PV output
        return fixed + per_tile

    if tile_n is None:
        tile_n = 128
        for cand in (1024, 512, 256, 128):
            if _tile_bytes(cand) <= int(0.7 * vmem_limit):
                tile_n = cand
                break

    tn = min(int(tile_n), N)
    # Guarantee >= 2 grid steps so megacore (v7x: 2 TensorCores) has work to shard.
    if B * pl.cdiv(N, tn) < 2 and N >= 16:
        tn = 8 * pl.cdiv(pl.cdiv(N, 2), 8)
    if tn != N and tn % 8:
        tn = 8 * pl.cdiv(tn, 8)
    n_pad = tn * pl.cdiv(N, tn)
    x_p = jnp.pad(x, ((0, 0), (0, n_pad - N), (0, 0))) if n_pad != N else x

    grid = (B, n_pad // tn)
    kernel = _make_kernel(heads, dim_head, qdim, M, m_pad)

    def _build(single_buffer_weights):
        # Constant-index-map operands don't need double-buffering; Buffered(1) halves
        # their VMEM footprint.  Fall back to default buffering if unsupported.
        wmode = ({"pipeline_mode": pl.Buffered(1)} if single_buffer_weights else {})
        return pl.pallas_call(
            kernel,
            out_shape=jax.ShapeDtypeStruct((B, n_pad, qdim), dtype),
            grid_spec=pltpu.PrefetchScalarGridSpec(
                num_scalar_prefetch=0,
                grid=grid,
                in_specs=[
                    pl.BlockSpec((1, tn, qdim), lambda b, n: (b, n, 0)),             # x tile
                    pl.BlockSpec((1, heads, dim_head, m_pad),
                                 lambda b, n: (b, 0, 0, 0)),                         # K^T (per batch)
                    pl.BlockSpec((1, heads, m_pad, dim_head),
                                 lambda b, n: (b, 0, 0, 0)),                         # V   (per batch)
                    pl.BlockSpec((qdim, inner), lambda b, n: (0, 0), **wmode),       # Wq^T (scaled)
                    pl.BlockSpec((heads, dim_head, qdim),
                                 lambda b, n: (0, 0, 0), **wmode),                   # Wo^T head-major
                    pl.BlockSpec((1, qdim), lambda b, n: (0, 0), **wmode),           # bias
                ],
                out_specs=pl.BlockSpec((1, tn, qdim), lambda b, n: (b, n, 0)),
            ),
            compiler_params=pltpu.CompilerParams(
                dimension_semantics=("parallel", "parallel"),
                vmem_limit_bytes=int(vmem_limit)),
        )

    try:
        out = _build(True)(x_p, k_hm, v_hm, wq_t, wo_hm, bo2)
        out = jax.block_until_ready(out)
    except Exception:
        # pipeline_mode=pl.Buffered(1) unsupported on this JAX version -> default buffering.
        out = _build(False)(x_p, k_hm, v_hm, wq_t, wo_hm, bo2)

    return out[:, :N, :] if n_pad != N else out


def reference(x, context, params, *, heads, dim_head):
    wq, wk, wv, wo, bo = params
    B, N, _ = x.shape
    M = context.shape[1]
    hp = jax.lax.Precision.HIGHEST
    q = jnp.einsum('bnq,iq->bni', x, wq, precision=hp)
    k = jnp.einsum('bmc,ic->bmi', context, wk, precision=hp)
    v = jnp.einsum('bmc,ic->bmi', context, wv, precision=hp)
    q = q.reshape(B, N, heads, dim_head).transpose(0, 2, 1, 3)
    k = k.reshape(B, M, heads, dim_head).transpose(0, 2, 1, 3)
    v = v.reshape(B, M, heads, dim_head).transpose(0, 2, 1, 3)
    s = jnp.einsum('bhnd,bhmd->bhnm', q, k, precision=hp) / math.sqrt(dim_head)
    a = jax.nn.softmax(s, axis=-1)
    o = jnp.einsum('bhnm,bhmd->bhnd', a, v, precision=hp)
    o = o.transpose(0, 2, 1, 3).reshape(B, N, heads * dim_head)
    return jnp.einsum('bni,qi->bnq', o, wo, precision=hp) + bo


def _run_case(key, B, N, M, query_dim, context_dim, heads, dim_head):
    inner_dim = heads * dim_head
    kx, kc, k1, k2, k3, k4, k5 = jax.random.split(key, 7)
    x = jax.random.normal(kx, (B, N, query_dim), dtype=jnp.float32)
    context = jax.random.normal(kc, (B, M, context_dim), dtype=jnp.float32)
    # PyTorch nn.Linear weight layout: (out_features, in_features); qkv_bias=False.
    wq = jax.random.normal(k1, (inner_dim, query_dim), dtype=jnp.float32) * 0.05
    wk = jax.random.normal(k2, (inner_dim, context_dim), dtype=jnp.float32) * 0.05
    wv = jax.random.normal(k3, (inner_dim, context_dim), dtype=jnp.float32) * 0.05
    wo = jax.random.normal(k4, (query_dim, inner_dim), dtype=jnp.float32) * 0.05
    bo = jax.random.normal(k5, (query_dim,), dtype=jnp.float32) * 0.05
    params = (wq, wk, wv, wo, bo)

    out = memory_efficient_cross_attention(x, context, params,
                                           heads=heads, dim_head=dim_head)
    out = jax.block_until_ready(out)
    ref = reference(x, context, params, heads=heads, dim_head=dim_head)
    assert out.shape == (B, N, query_dim)
    assert jnp.allclose(out, ref, atol=3e-3, rtol=3e-3), (
        "mismatch vs JAX reference: max abs diff = %e"
        % float(jnp.max(jnp.abs(out - ref))))


if __name__ == "__main__":
    key = jax.random.PRNGKey(0)
    k_a, k_b = jax.random.split(key)

    # Case 1: batch=2, single N-tile, context length (8) not a multiple of 128
    # (exercises the zero-padded-key denominator correction).
    _run_case(k_a, B=2, N=16, M=8, query_dim=32, context_dim=32, heads=2, dim_head=16)

    # Case 2: batch=1 with N=20 — exercises the megacore N-split, N padding, the
    # multi-tile grid path, and context_dim != query_dim.
    _run_case(k_b, B=1, N=20, M=8, query_dim=32, context_dim=48, heads=2, dim_head=16)

    print("KERNEL_OK")
</pallas_src>

<mosaic_0001>
module attributes {stable_mosaic.version = 11 : i64} {
  func.func @kernel(%arg0: i32, %arg1: i32, %arg2: memref<1x16x32xf32, #tpu.memory_space<vmem>>, %arg3: memref<1x2x16x128xf32, #tpu.memory_space<vmem>>, %arg4: memref<1x2x128x16xf32, #tpu.memory_space<vmem>>, %arg5: memref<32x32xf32, #tpu.memory_space<vmem>>, %arg6: memref<2x16x32xf32, #tpu.memory_space<vmem>>, %arg7: memref<1x32xf32, #tpu.memory_space<vmem>>, %arg8: memref<1x16x32xf32, #tpu.memory_space<vmem>>) attributes {dimension_semantics = [#tpu.dimension_semantics<parallel>, #tpu.dimension_semantics<parallel>], iteration_bounds = array<i64: 2, 1>, scalar_prefetch = 0 : i64, scratch_operands = 0 : i64, tpu.core_type = #tpu.core_type<tc>, window_params = [{transform_indices = @transform_0, window_bounds = array<i64: 1, 16, 32>}, {transform_indices = @transform_1, window_bounds = array<i64: 1, 2, 16, 128>}, {transform_indices = @transform_2, window_bounds = array<i64: 1, 2, 128, 16>}, {pipeline_mode = #tpu.pipeline_mode<synchronous>, transform_indices = @transform_3, window_bounds = array<i64: 32, 32>}, {pipeline_mode = #tpu.pipeline_mode<synchronous>, transform_indices = @transform_4, window_bounds = array<i64: 2, 16, 32>}, {pipeline_mode = #tpu.pipeline_mode<synchronous>, transform_indices = @transform_5, window_bounds = array<i64: 1, 32>}, {transform_indices = @transform_6, window_bounds = array<i64: 1, 16, 32>}]} {
    %c0 = arith.constant 0 : index
    %c0_0 = arith.constant 0 : index
    %c0_1 = arith.constant 0 : index
    %0 = vector.load %arg2[%c0, %c0_0, %c0_1] : memref<1x16x32xf32, #tpu.memory_space<vmem>>, vector<1x16x32xf32>
    %1 = vector.shape_cast %0 : vector<1x16x32xf32> to vector<16x32xf32>
    %c0_2 = arith.constant 0 : index
    %c0_3 = arith.constant 0 : index
    %2 = vector.load %arg5[%c0_2, %c0_3] : memref<32x32xf32, #tpu.memory_space<vmem>>, vector<32x32xf32>
    %cst = arith.constant dense<0.000000e+00> : vector<16x32xf32>
    %3 = tpu.matmul %1, %2, %cst {dimension_numbers = #tpu.dot_dimension_numbers<[1], [0], [0], [1], [0, 0, 1, 1], [], []>} : vector<16x32xf32>, vector<32x32xf32>, vector<16x32xf32> -> vector<16x32xf32>
    %cst_4 = arith.constant 0.000000e+00 : f32
    %4 = vector.broadcast %cst_4 : f32 to vector<16x32xf32>
    %5 = vector.extract_strided_slice %3 {offsets = [0, 0], sizes = [16, 16], strides = [1, 1]} : vector<16x32xf32> to vector<16x16xf32>
    %c0_5 = arith.constant 0 : index
    %c0_6 = arith.constant 0 : index
    %c0_7 = arith.constant 0 : index
    %c0_8 = arith.constant 0 : index
    %6 = vector.load %arg3[%c0_5, %c0_6, %c0_7, %c0_8] : memref<1x2x16x128xf32, #tpu.memory_space<vmem>>, vector<1x1x16x128xf32>
    %7 = vector.shape_cast %6 : vector<1x1x16x128xf32> to vector<16x128xf32>
    %c0_9 = arith.constant 0 : index
    %c0_10 = arith.constant 0 : index
    %c0_11 = arith.constant 0 : index
    %c0_12 = arith.constant 0 : index
    %8 = vector.load %arg4[%c0_9, %c0_10, %c0_11, %c0_12] : memref<1x2x128x16xf32, #tpu.memory_space<vmem>>, vector<1x1x128x16xf32>
    %9 = vector.shape_cast %8 : vector<1x1x128x16xf32> to vector<128x16xf32>
    %cst_13 = arith.constant dense<0.000000e+00> : vector<16x128xf32>
    %10 = tpu.matmul %5, %7, %cst_13 {dimension_numbers = #tpu.dot_dimension_numbers<[1], [0], [0], [1], [0, 0, 1, 1], [], []>} : vector<16x16xf32>, vector<16x128xf32>, vector<16x128xf32> -> vector<16x128xf32>
    %cst_14 = arith.constant dense<0xFF800000> : vector<16xf32>
    %11 = vector.multi_reduction <maximumf>, %10, %cst_14 [1] : vector<16x128xf32> to vector<16xf32>
    %12 = vector.shape_cast %11 : vector<16xf32> to vector<16x1xf32>
    %13 = vector.broadcast %12 : vector<16x1xf32> to vector<16x128xf32>
    %14 = arith.subf %10, %13 : vector<16x128xf32>
    %15 = math.exp %14 : vector<16x128xf32>
    %cst_15 = arith.constant dense<0.000000e+00> : vector<16xf32>
    %16 = vector.multi_reduction <add>, %15, %cst_15 [1] : vector<16x128xf32> to vector<16xf32>
    %17 = vector.shape_cast %16 : vector<16xf32> to vector<16x1xf32>
    %cst_16 = arith.constant 0.000000e+00 : f32
    %18 = vector.broadcast %cst_16 : f32 to vector<16x1xf32>
    %19 = arith.subf %18, %12 : vector<16x1xf32>
    %20 = math.exp %19 : vector<16x1xf32>
    %cst_17 = arith.constant 1.200000e+02 : f32
    %21 = vector.broadcast %cst_17 : f32 to vector<16x1xf32>
    %22 = arith.mulf %21, %20 : vector<16x1xf32>
    %23 = arith.subf %17, %22 : vector<16x1xf32>
    %cst_18 = arith.constant dense<0.000000e+00> : vector<16x16xf32>
    %24 = tpu.matmul %15, %9, %cst_18 {dimension_numbers = #tpu.dot_dimension_numbers<[1], [0], [0], [1], [0, 0, 1, 1], [], []>} : vector<16x128xf32>, vector<128x16xf32>, vector<16x16xf32> -> vector<16x16xf32>
    %25 = tpu.reciprocal %23 : vector<16x1xf32> -> vector<16x1xf32>
    %26 = vector.broadcast %25 : vector<16x1xf32> to vector<16x16xf32>
    %27 = arith.mulf %24, %26 : vector<16x16xf32>
    %c0_19 = arith.constant 0 : index
    %c0_20 = arith.constant 0 : index
    %c0_21 = arith.constant 0 : index
    %28 = vector.load %arg6[%c0_19, %c0_20, %c0_21] : memref<2x16x32xf32, #tpu.memory_space<vmem>>, vector<1x16x32xf32>
    %29 = vector.shape_cast %28 : vector<1x16x32xf32> to vector<16x32xf32>
    %cst_22 = arith.constant dense<0.000000e+00> : vector<16x32xf32>
    %30 = tpu.matmul %27, %29, %cst_22 {dimension_numbers = #tpu.dot_dimension_numbers<[1], [0], [0], [1], [0, 0, 1, 1], [], []>} : vector<16x16xf32>, vector<16x32xf32>, vector<16x32xf32> -> vector<16x32xf32>
    %31 = arith.addf %4, %30 : vector<16x32xf32>
    %32 = vector.extract_strided_slice %3 {offsets = [0, 16], sizes = [16, 16], strides = [1, 1]} : vector<16x32xf32> to vector<16x16xf32>
    %c0_23 = arith.constant 0 : index
    %c1 = arith.constant 1 : index
    %c0_24 = arith.constant 0 : index
    %c0_25 = arith.constant 0 : index
    %33 = vector.load %arg3[%c0_23, %c1, %c0_24, %c0_25] : memref<1x2x16x128xf32, #tpu.memory_space<vmem>>, vector<1x1x16x128xf32>
    %34 = vector.shape_cast %33 : vector<1x1x16x128xf32> to vector<16x128xf32>
    %c0_26 = arith.constant 0 : index
    %c1_27 = arith.constant 1 : index
    %c0_28 = arith.constant 0 : index
    %c0_29 = arith.constant 0 : index
    %35 = vector.load %arg4[%c0_26, %c1_27, %c0_28, %c0_29] : memref<1x2x128x16xf32, #tpu.memory_space<vmem>>, vector<1x1x128x16xf32>
    %36 = vector.shape_cast %35 : vector<1x1x128x16xf32> to vector<128x16xf32>
    %cst_30 = arith.constant dense<0.000000e+00> : vector<16x128xf32>
    %37 = tpu.matmul %32, %34, %cst_30 {dimension_numbers = #tpu.dot_dimension_numbers<[1], [0], [0], [1], [0, 0, 1, 1], [], []>} : vector<16x16xf32>, vector<16x128xf32>, vector<16x128xf32> -> vector<16x128xf32>
    %cst_31 = arith.constant dense<0xFF800000> : vector<16xf32>
    %38 = vector.multi_reduction <maximumf>, %37, %cst_31 [1] : vector<16x128xf32> to vector<16xf32>
    %39 = vector.shape_cast %38 : vector<16xf32> to vector<16x1xf32>
    %40 = vector.broadcast %39 : vector<16x1xf32> to vector<16x128xf32>
    %41 = arith.subf %37, %40 : vector<16x128xf32>
    %42 = math.exp %41 : vector<16x128xf32>
    %cst_32 = arith.constant dense<0.000000e+00> : vector<16xf32>
    %43 = vector.multi_reduction <add>, %42, %cst_32 [1] : vector<16x128xf32> to vector<16xf32>
    %44 = vector.shape_cast %43 : vector<16xf32> to vector<16x1xf32>
    %cst_33 = arith.constant 0.000000e+00 : f32
    %45 = vector.broadcast %cst_33 : f32 to vector<16x1xf32>
    %46 = arith.subf %45, %39 : vector<16x1xf32>
    %47 = math.exp %46 : vector<16x1xf32>
    %cst_34 = arith.constant 1.200000e+02 : f32
    %48 = vector.broadcast %cst_34 : f32 to vector<16x1xf32>
    %49 = arith.mulf %48, %47 : vector<16x1xf32>
    %50 = arith.subf %44, %49 : vector<16x1xf32>
    %cst_35 = arith.constant dense<0.000000e+00> : vector<16x16xf32>
    %51 = tpu.matmul %42, %36, %cst_35 {dimension_numbers = #tpu.dot_dimension_numbers<[1], [0], [0], [1], [0, 0, 1, 1], [], []>} : vector<16x128xf32>, vector<128x16xf32>, vector<16x16xf32> -> vector<16x16xf32>
    %52 = tpu.reciprocal %50 : vector<16x1xf32> -> vector<16x1xf32>
    %53 = vector.broadcast %52 : vector<16x1xf32> to vector<16x16xf32>
    %54 = arith.mulf %51, %53 : vector<16x16xf32>
    %c1_36 = arith.constant 1 : index
    %c0_37 = arith.constant 0 : index
    %c0_38 = arith.constant 0 : index
    %55 = vector.load %arg6[%c1_36, %c0_37, %c0_38] : memref<2x16x32xf32, #tpu.memory_space<vmem>>, vector<1x16x32xf32>
    %56 = vector.shape_cast %55 : vector<1x16x32xf32> to vector<16x32xf32>
    %cst_39 = arith.constant dense<0.000000e+00> : vector<16x32xf32>
    %57 = tpu.matmul %54, %56, %cst_39 {dimension_numbers = #tpu.dot_dimension_numbers<[1], [0], [0], [1], [0, 0, 1, 1], [], []>} : vector<16x16xf32>, vector<16x32xf32>, vector<16x32xf32> -> vector<16x32xf32>
    %58 = arith.addf %31, %57 : vector<16x32xf32>
    %c0_40 = arith.constant 0 : index
    %c0_41 = arith.constant 0 : index
    %59 = vector.load %arg7[%c0_40, %c0_41] : memref<1x32xf32, #tpu.memory_space<vmem>>, vector<1x32xf32>
    %60 = vector.broadcast %59 : vector<1x32xf32> to vector<16x32xf32>
    %61 = arith.addf %58, %60 : vector<16x32xf32>
    %c0_42 = arith.constant 0 : index
    %c0_43 = arith.constant 0 : index
    %c0_44 = arith.constant 0 : index
    %62 = vector.load %arg8[%c0_42, %c0_43, %c0_44] : memref<1x16x32xf32, #tpu.memory_space<vmem>>, vector<1x16x32xf32>
    %63 = vector.shape_cast %62 : vector<1x16x32xf32> to vector<16x32xf32>
    %64 = vector.shape_cast %61 : vector<16x32xf32> to vector<1x16x32xf32>
    tpu.vector_store %arg8[%c0_42, %c0_43, %c0_44], %64 {strides = array<i32>} : memref<1x16x32xf32, #tpu.memory_space<vmem>>, vector<1x16x32xf32>,
    return
  }
  func.func @transform_0(%arg0: i32, %arg1: i32) -> (i32, i32, i32) {
    %c0_i32 = arith.constant 0 : i32
    %c0_i32_0 = arith.constant 0 : i32
    return %arg0, %arg1, %c0_i32 : i32, i32, i32
  }
  func.func @transform_1(%arg0: i32, %arg1: i32) -> (i32, i32, i32, i32) {
    %c0_i32 = arith.constant 0 : i32
    %c0_i32_0 = arith.constant 0 : i32
    %c0_i32_1 = arith.constant 0 : i32
    %c0_i32_2 = arith.constant 0 : i32
    return %arg0, %c0_i32, %c0_i32_0, %c0_i32_1 : i32, i32, i32, i32
  }
  func.func @transform_2(%arg0: i32, %arg1: i32) -> (i32, i32, i32, i32) {
    %c0_i32 = arith.constant 0 : i32
    %c0_i32_0 = arith.constant 0 : i32
    %c0_i32_1 = arith.constant 0 : i32
    %c0_i32_2 = arith.constant 0 : i32
    return %arg0, %c0_i32, %c0_i32_0, %c0_i32_1 : i32, i32, i32, i32
  }
  func.func @transform_3(%arg0: i32, %arg1: i32) -> (i32, i32) {
    %c0_i32 = arith.constant 0 : i32
    %c0_i32_0 = arith.constant 0 : i32
    %c0_i32_1 = arith.constant 0 : i32
    return %c0_i32, %c0_i32_0 : i32, i32
  }
  func.func @transform_4(%arg0: i32, %arg1: i32) -> (i32, i32, i32) {
    %c0_i32 = arith.constant 0 : i32
    %c0_i32_0 = arith.constant 0 : i32
    %c0_i32_1 = arith.constant 0 : i32
    %c0_i32_2 = arith.constant 0 : i32
    return %c0_i32, %c0_i32_0, %c0_i32_1 : i32, i32, i32
  }
  func.func @transform_5(%arg0: i32, %arg1: i32) -> (i32, i32) {
    %c0_i32 = arith.constant 0 : i32
    %c0_i32_0 = arith.constant 0 : i32
    %c0_i32_1 = arith.constant 0 : i32
    return %c0_i32, %c0_i32_0 : i32, i32
  }
  func.func @transform_6(%arg0: i32, %arg1: i32) -> (i32, i32, i32) {
    %c0_i32 = arith.constant 0 : i32
    %c0_i32_0 = arith.constant 0 : i32
    return %arg0, %arg1, %c0_i32 : i32, i32, i32
  }
}

module attributes {stable_mosaic.version = 11 : i64} {
  func.func @kernel(%arg0: i32, %arg1: i32, %arg2: memref<1x16x32xf32, #tpu.memory_space<vmem>>, %arg3: memref<1x2x16x128xf32, #tpu.memory_space<vmem>>, %arg4: memref<1x2x128x16xf32, #tpu.memory_space<vmem>>, %arg5: memref<32x32xf32, #tpu.memory_space<vmem>>, %arg6: memref<2x16x32xf32, #tpu.memory_space<vmem>>, %arg7: memref<1x32xf32, #tpu.memory_space<vmem>>, %arg8: memref<1x16x32xf32, #tpu.memory_space<vmem>>) attributes {dimension_semantics = [#tpu.dimension_semantics<parallel>, #tpu.dimension_semantics<parallel>], iteration_bounds = array<i64: 2, 1>, scalar_prefetch = 0 : i64, scratch_operands = 0 : i64, tpu.core_type = #tpu.core_type<tc>, window_params = [{transform_indices = @transform_0, window_bounds = array<i64: 1, 16, 32>}, {transform_indices = @transform_1, window_bounds = array<i64: 1, 2, 16, 128>}, {transform_indices = @transform_2, window_bounds = array<i64: 1, 2, 128, 16>}, {pipeline_mode = #tpu.pipeline_mode<synchronous>, transform_indices = @transform_3, window_bounds = array<i64: 32, 32>}, {pipeline_mode = #tpu.pipeline_mode<synchronous>, transform_indices = @transform_4, window_bounds = array<i64: 2, 16, 32>}, {pipeline_mode = #tpu.pipeline_mode<synchronous>, transform_indices = @transform_5, window_bounds = array<i64: 1, 32>}, {transform_indices = @transform_6, window_bounds = array<i64: 1, 16, 32>}]} {
    %c0 = arith.constant 0 : index
    %c0_0 = arith.constant 0 : index
    %c0_1 = arith.constant 0 : index
    %0 = vector.load %arg2[%c0, %c0_0, %c0_1] : memref<1x16x32xf32, #tpu.memory_space<vmem>>, vector<1x16x32xf32>
    %1 = vector.shape_cast %0 : vector<1x16x32xf32> to vector<16x32xf32>
    %c0_2 = arith.constant 0 : index
    %c0_3 = arith.constant 0 : index
    %2 = vector.load %arg5[%c0_2, %c0_3] : memref<32x32xf32, #tpu.memory_space<vmem>>, vector<32x32xf32>
    %cst = arith.constant dense<0.000000e+00> : vector<16x32xf32>
    %3 = tpu.matmul %1, %2, %cst {dimension_numbers = #tpu.dot_dimension_numbers<[1], [0], [0], [1], [0, 0, 1, 1], [], []>} : vector<16x32xf32>, vector<32x32xf32>, vector<16x32xf32> -> vector<16x32xf32>
    %cst_4 = arith.constant 0.000000e+00 : f32
    %4 = vector.broadcast %cst_4 : f32 to vector<16x32xf32>
    %5 = vector.extract_strided_slice %3 {offsets = [0, 0], sizes = [16, 16], strides = [1, 1]} : vector<16x32xf32> to vector<16x16xf32>
    %c0_5 = arith.constant 0 : index
    %c0_6 = arith.constant 0 : index
    %c0_7 = arith.constant 0 : index
    %c0_8 = arith.constant 0 : index
    %6 = vector.load %arg3[%c0_5, %c0_6, %c0_7, %c0_8] : memref<1x2x16x128xf32, #tpu.memory_space<vmem>>, vector<1x1x16x128xf32>
    %7 = vector.shape_cast %6 : vector<1x1x16x128xf32> to vector<16x128xf32>
    %c0_9 = arith.constant 0 : index
    %c0_10 = arith.constant 0 : index
    %c0_11 = arith.constant 0 : index
    %c0_12 = arith.constant 0 : index
    %8 = vector.load %arg4[%c0_9, %c0_10, %c0_11, %c0_12] : memref<1x2x128x16xf32, #tpu.memory_space<vmem>>, vector<1x1x128x16xf32>
    %9 = vector.shape_cast %8 : vector<1x1x128x16xf32> to vector<128x16xf32>
    %cst_13 = arith.constant dense<0.000000e+00> : vector<16x128xf32>
    %10 = tpu.matmul %5, %7, %cst_13 {dimension_numbers = #tpu.dot_dimension_numbers<[1], [0], [0], [1], [0, 0, 1, 1], [], []>} : vector<16x16xf32>, vector<16x128xf32>, vector<16x128xf32> -> vector<16x128xf32>
    %cst_14 = arith.constant dense<0xFF800000> : vector<16xf32>
    %11 = vector.multi_reduction <maximumf>, %10, %cst_14 [1] : vector<16x128xf32> to vector<16xf32>
    %12 = vector.shape_cast %11 : vector<16xf32> to vector<16x1xf32>
    %13 = vector.broadcast %12 : vector<16x1xf32> to vector<16x128xf32>
    %14 = arith.subf %10, %13 : vector<16x128xf32>
    %15 = math.exp %14 : vector<16x128xf32>
    %cst_15 = arith.constant dense<0.000000e+00> : vector<16xf32>
    %16 = vector.multi_reduction <add>, %15, %cst_15 [1] : vector<16x128xf32> to vector<16xf32>
    %17 = vector.shape_cast %16 : vector<16xf32> to vector<16x1xf32>
    %cst_16 = arith.constant 0.000000e+00 : f32
    %18 = vector.broadcast %cst_16 : f32 to vector<16x1xf32>
    %19 = arith.subf %18, %12 : vector<16x1xf32>
    %20 = math.exp %19 : vector<16x1xf32>
    %cst_17 = arith.constant 1.200000e+02 : f32
    %21 = vector.broadcast %cst_17 : f32 to vector<16x1xf32>
    %22 = arith.mulf %21, %20 : vector<16x1xf32>
    %23 = arith.subf %17, %22 : vector<16x1xf32>
    %cst_18 = arith.constant dense<0.000000e+00> : vector<16x16xf32>
    %24 = tpu.matmul %15, %9, %cst_18 {dimension_numbers = #tpu.dot_dimension_numbers<[1], [0], [0], [1], [0, 0, 1, 1], [], []>} : vector<16x128xf32>, vector<128x16xf32>, vector<16x16xf32> -> vector<16x16xf32>
    %25 = tpu.reciprocal %23 : vector<16x1xf32> -> vector<16x1xf32>
    %26 = vector.broadcast %25 : vector<16x1xf32> to vector<16x16xf32>
    %27 = arith.mulf %24, %26 : vector<16x16xf32>
    %c0_19 = arith.constant 0 : index
    %c0_20 = arith.constant 0 : index
    %c0_21 = arith.constant 0 : index
    %28 = vector.load %arg6[%c0_19, %c0_20, %c0_21] : memref<2x16x32xf32, #tpu.memory_space<vmem>>, vector<1x16x32xf32>
    %29 = vector.shape_cast %28 : vector<1x16x32xf32> to vector<16x32xf32>
    %cst_22 = arith.constant dense<0.000000e+00> : vector<16x32xf32>
    %30 = tpu.matmul %27, %29, %cst_22 {dimension_numbers = #tpu.dot_dimension_numbers<[1], [0], [0], [1], [0, 0, 1, 1], [], []>} : vector<16x16xf32>, vector<16x32xf32>, vector<16x32xf32> -> vector<16x32xf32>
    %31 = arith.addf %4, %30 : vector<16x32xf32>
    %32 = vector.extract_strided_slice %3 {offsets = [0, 16], sizes = [16, 16], strides = [1, 1]} : vector<16x32xf32> to vector<16x16xf32>
    %c0_23 = arith.constant 0 : index
    %c1 = arith.constant 1 : index
    %c0_24 = arith.constant 0 : index
    %c0_25 = arith.constant 0 : index
    %33 = vector.load %arg3[%c0_23, %c1, %c0_24, %c0_25] : memref<1x2x16x128xf32, #tpu.memory_space<vmem>>, vector<1x1x16x128xf32>
    %34 = vector.shape_cast %33 : vector<1x1x16x128xf32> to vector<16x128xf32>
    %c0_26 = arith.constant 0 : index
    %c1_27 = arith.constant 1 : index
    %c0_28 = arith.constant 0 : index
    %c0_29 = arith.constant 0 : index
    %35 = vector.load %arg4[%c0_26, %c1_27, %c0_28, %c0_29] : memref<1x2x128x16xf32, #tpu.memory_space<vmem>>, vector<1x1x128x16xf32>
    %36 = vector.shape_cast %35 : vector<1x1x128x16xf32> to vector<128x16xf32>
    %cst_30 = arith.constant dense<0.000000e+00> : vector<16x128xf32>
    %37 = tpu.matmul %32, %34, %cst_30 {dimension_numbers = #tpu.dot_dimension_numbers<[1], [0], [0], [1], [0, 0, 1, 1], [], []>} : vector<16x16xf32>, vector<16x128xf32>, vector<16x128xf32> -> vector<16x128xf32>
    %cst_31 = arith.constant dense<0xFF800000> : vector<16xf32>
    %38 = vector.multi_reduction <maximumf>, %37, %cst_31 [1] : vector<16x128xf32> to vector<16xf32>
    %39 = vector.shape_cast %38 : vector<16xf32> to vector<16x1xf32>
    %40 = vector.broadcast %39 : vector<16x1xf32> to vector<16x128xf32>
    %41 = arith.subf %37, %40 : vector<16x128xf32>
    %42 = math.exp %41 : vector<16x128xf32>
    %cst_32 = arith.constant dense<0.000000e+00> : vector<16xf32>
    %43 = vector.multi_reduction <add>, %42, %cst_32 [1] : vector<16x128xf32> to vector<16xf32>
    %44 = vector.shape_cast %43 : vector<16xf32> to vector<16x1xf32>
    %cst_33 = arith.constant 0.000000e+00 : f32
    %45 = vector.broadcast %cst_33 : f32 to vector<16x1xf32>
    %46 = arith.subf %45, %39 : vector<16x1xf32>
    %47 = math.exp %46 : vector<16x1xf32>
    %cst_34 = arith.constant 1.200000e+02 : f32
    %48 = vector.broadcast %cst_34 : f32 to vector<16x1xf32>
    %49 = arith.mulf %48, %47 : vector<16x1xf32>
    %50 = arith.subf %44, %49 : vector<16x1xf32>
    %cst_35 = arith.constant dense<0.000000e+00> : vector<16x16xf32>
    %51 = tpu.matmul %42, %36, %cst_35 {dimension_numbers = #tpu.dot_dimension_numbers<[1], [0], [0], [1], [0, 0, 1, 1], [], []>} : vector<16x128xf32>, vector<128x16xf32>, vector<16x16xf32> -> vector<16x16xf32>
    %52 = tpu.reciprocal %50 : vector<16x1xf32> -> vector<16x1xf32>
    %53 = vector.broadcast %52 : vector<16x1xf32> to vector<16x16xf32>
    %54 = arith.mulf %51, %53 : vector<16x16xf32>
    %c1_36 = arith.constant 1 : index
    %c0_37 = arith.constant 0 : index
    %c0_38 = arith.constant 0 : index
    %55 = vector.load %arg6[%c1_36, %c0_37, %c0_38] : memref<2x16x32xf32, #tpu.memory_space<vmem>>, vector<1x16x32xf32>
    %56 = vector.shape_cast %55 : vector<1x16x32xf32> to vector<16x32xf32>
    %cst_39 = arith.constant dense<0.000000e+00> : vector<16x32xf32>
    %57 = tpu.matmul %54, %56, %cst_39 {dimension_numbers = #tpu.dot_dimension_numbers<[1], [0], [0], [1], [0, 0, 1, 1], [], []>} : vector<16x16xf32>, vector<16x32xf32>, vector<16x32xf32> -> vector<16x32xf32>
    %58 = arith.addf %31, %57 : vector<16x32xf32>
    %c0_40 = arith.constant 0 : index
    %c0_41 = arith.constant 0 : index
    %59 = vector.load %arg7[%c0_40, %c0_41] : memref<1x32xf32, #tpu.memory_space<vmem>>, vector<1x32xf32>
    %60 = vector.broadcast %59 : vector<1x32xf32> to vector<16x32xf32>
    %61 = arith.addf %58, %60 : vector<16x32xf32>
    %c0_42 = arith.constant 0 : index
    %c0_43 = arith.constant 0 : index
    %c0_44 = arith.constant 0 : index
    %62 = vector.load %arg8[%c0_42, %c0_43, %c0_44] : memref<1x16x32xf32, #tpu.memory_space<vmem>>, vector<1x16x32xf32>
    %63 = vector.shape_cast %62 : vector<1x16x32xf32> to vector<16x32xf32>
    %64 = vector.shape_cast %61 : vector<16x32xf32> to vector<1x16x32xf32>
    tpu.vector_store %arg8[%c0_42, %c0_43, %c0_44], %64 {strides = array<i32>} : memref<1x16x32xf32, #tpu.memory_space<vmem>>, vector<1x16x32xf32>,
    return
  }
  func.func @transform_0(%arg0: i32, %arg1: i32) -> (i32, i32, i32) {
    %c0_i32 = arith.constant 0 : i32
    %c0_i32_0 = arith.constant 0 : i32
    return %arg0, %arg1, %c0_i32 : i32, i32, i32
  }
  func.func @transform_1(%arg0: i32, %arg1: i32) -> (i32, i32, i32, i32) {
    %c0_i32 = arith.constant 0 : i32
    %c0_i32_0 = arith.constant 0 : i32
    %c0_i32_1 = arith.constant 0 : i32
    %c0_i32_2 = arith.constant 0 : i32
    return %arg0, %c0_i32, %c0_i32_0, %c0_i32_1 : i32, i32, i32, i32
  }
  func.func @transform_2(%arg0: i32, %arg1: i32) -> (i32, i32, i32, i32) {
    %c0_i32 = arith.constant 0 : i32
    %c0_i32_0 = arith.constant 0 : i32
    %c0_i32_1 = arith.constant 0 : i32
    %c0_i32_2 = arith.constant 0 : i32
    return %arg0, %c0_i32, %c0_i32_0, %c0_i32_1 : i32, i32, i32, i32
  }
  func.func @transform_3(%arg0: i32, %arg1: i32) -> (i32, i32) {
    %c0_i32 = arith.constant 0 : i32
    %c0_i32_0 = arith.constant 0 : i32
    %c0_i32_1 = arith.constant 0 : i32
    return %c0_i32, %c0_i32_0 : i32, i32
  }
  func.func @transform_4(%arg0: i32, %arg1: i32) -> (i32, i32, i32) {
    %c0_i32 = arith.constant 0 : i32
    %c0_i32_0 = arith.constant 0 : i32
    %c0_i32_1 = arith.constant 0 : i32
    %c0_i32_2 = arith.constant 0 : i32
    return %c0_i32, %c0_i32_0, %c0_i32_1 : i32, i32, i32
  }
  func.func @transform_5(%arg0: i32, %arg1: i32) -> (i32, i32) {
    %c0_i32 = arith.constant 0 : i32
    %c0_i32_0 = arith.constant 0 : i32
    %c0_i32_1 = arith.constant 0 : i32
    return %c0_i32, %c0_i32_0 : i32, i32
  }
  func.func @transform_6(%arg0: i32, %arg1: i32) -> (i32, i32, i32) {
    %c0_i32 = arith.constant 0 : i32
    %c0_i32_0 = arith.constant 0 : i32
    return %arg0, %arg1, %c0_i32 : i32, i32, i32
  }
}

</mosaic_0001>

<llo_original>
// kernel: tpu_custom_call.1
$region0: #{tpu_custom_call.1}
  #allocation0 [shape = 'u32[]', space=smem, size = 0x4, offset = 0x4, fixed_abs, tag = 'smem constant byte address 0x4 - core index']
  #allocation1 [shape = 'u32[144,128]{1,0:T(1,128)}', space=vmem, size = 0x12000, scoped, tag = 'internal scratch']
  %s0 = inlined_call_operand.hbm [shape: f32[2,16,32], index: 0, kind: input, shape index: {}]
  %s1 = inlined_call_operand.hbm [shape: f32[2,2,16,128], index: 1, kind: input, shape index: {}]
  %s2 = inlined_call_operand.hbm [shape: f32[2,2,128,16], index: 2, kind: input, shape index: {}]
  %s3 = inlined_call_operand.hbm [shape: f32[32,32], index: 3, kind: input, shape index: {}]
  %s4 = inlined_call_operand.hbm [shape: f32[2,16,32], index: 4, kind: input, shape index: {}]
  %s5 = inlined_call_operand.hbm [shape: f32[1,32], index: 5, kind: input, shape index: {}]
  %s6 = inlined_call_operand.hbm [shape: f32[2,16,32], index: 6, kind: output, shape index: {}]
  %s7 = sld [smem:[#allocation0]]
  $region81: #{tpu_custom_call.1} parent=0
    _
  %s9 = ssub.s32 1, %s7
  %s10 = scalar_select 0, %s9, %s7
  $region1: #{tpu_custom_call.1} parent=0
    #allocation2 [shape = 'u8[16384]{0}', space=vmem, size = 0x4000, scoped, tag = 'input window, operand 0']
    #allocation3 [shape = 's32[2]{0}', space=sflag, size = 0x8, scoped, tag = 'scoped memory for tpu_custom_call.1']
    #allocation4 [shape = 's32[2]{0}', space=sflag, size = 0x8, scoped, tag = 'scoped memory for tpu_custom_call.1']
    #allocation5 [shape = 'u8[32768]{0}', space=vmem, size = 0x8000, scoped, tag = 'input window, operand 1']
    #allocation6 [shape = 's32[2]{0}', space=sflag, size = 0x8, scoped, tag = 'scoped memory for tpu_custom_call.1']
    #allocation7 [shape = 'u8[262144]{0}', space=vmem, size = 0x40000, scoped, tag = 'input window, operand 2']
    #allocation8 [shape = 'u8[16384]{0}', space=vmem, size = 0x4000, scoped, tag = 'input window, operand 3, single buffered']
    #allocation9 [shape = 's32[1]{0}', space=sflag, size = 0x4, scoped, tag = 'scoped memory for tpu_custom_call.1']
    #allocation10 [shape = 'u8[16384]{0}', space=vmem, size = 0x4000, scoped, tag = 'input window, operand 4, single buffered']
    #allocation11 [shape = 'u8[512]{0}', space=vmem, size = 0x400, scoped, tag = 'input window, operand 5, single buffered']
    #allocation12 [shape = 's32[1]{0}', space=sflag, size = 0x4, scoped, tag = 'scoped memory for tpu_custom_call.1']
    #allocation13 [shape = 'u8[16384]{0}', space=vmem, size = 0x4000, scoped, tag = 'output window, operand 0']
    %11 = vsyncpa [#allocation3], 0
    %s12 = scalar_lea.sflag [#allocation3], 1
    %13 = vsyncpa %s12, 0
    %14 = vsyncpa [#allocation6], 0
    %s15 = scalar_lea.sflag [#allocation6], 1
    %16 = vsyncpa %s15, 0
    %17 = vsyncpa [#allocation9], 0
    %18 = vsyncpa [#allocation12], 0
    %19 = vsyncpa [#allocation4], 0
    %s20 = scalar_lea.sflag [#allocation4], 1
    %21 = vsyncpa %s20, 0
    loop: start=0, step=1, limit=4
    $region2: #{tpu_custom_call.1} parent=1 // loop_pre_header
      _
    $region3: #{tpu_custom_call.1} parent=1 // loop_header
      %s23 = sphi 0, %s27
      %p24 = scmp.ge.s32.totalorder %s23, 4
      %s30 = sphi 0, %s42
      %s31 = sphi 0, %s38
      %s32 = sphi 0, %s30
      %s33 = sphi 0, %s31
      %s34 = sphi 0, %s32
      %s35 = sphi 0, %s33
      %s47 = sphi 0, %s49
      %s50 = sphi 0, %s47
      %s51 = sphi 0, %s50
      %s67 = sphi 0, %s51
      %s73 = sphi 0, %s75
      %s76 = sphi 0, %s73
      %s77 = sphi 0, %s76
      %s93 = sphi 0, %s77
      %s99 = sphi 0, %s101
      %s102 = sphi 0, %s99
      %s103 = sphi 0, %s102
      %s119 = sphi 0, %s103
      %s123 = sphi 0, %s123
      %s125 = sphi 0, %s123
      %s126 = sphi 0, %s125
      %s140 = sphi 0, %s126
      %s144 = sphi 0, %s144
      %s146 = sphi 0, %s144
      %s147 = sphi 0, %s146
      %s161 = sphi 0, %s147
      %s165 = sphi 0, %s165
      %s167 = sphi 0, %s165
      %s168 = sphi 0, %s167
      %s182 = sphi 0, %s168
      %s190 = sphi 0, %s192
      %s193 = sphi 0, %s190
      %s194 = sphi 0, %s193
      %s210 = sphi 0, %s194
    $region4: #{tpu_custom_call.1} parent=1 // loop_header_branch
      %26 = sbr.rel (%p24) target = $region8
    $region5: #{tpu_custom_call.1} parent=1 // loop_body
      %s28 = ssub.s32 %s23, 1
      %s29 = ssub.s32 %s23, 2
      %s36 = sadd.s32 1, %s31
      %p37 = scmp.ge.s32.totalorder %s36, 1
      %s38 = scalar_select %p37, 0, %s36
      %s39 = sadd.s32 1, %s30
      %s40 = scalar_select %p37, %s39, %s30
      %p41 = scmp.ge.s32.totalorder %s40, 2
      %s42 = scalar_select %p41, 0, %s40
      %s43 = ssub.s32 %s30, %s42
      %s44 = ssub.s32 %s31, %s38
      %s45 = sor.u32 %s43, %s44
      %p46 = scmp.eq.s32.totalorder %s45, 0
      %s48 = sadd.s32 %s47, 1
      %s49 = scalar_select %p46, %s47, %s48
      %p52 = pneg %p46
      %p53 = scmp.eq.s32.totalorder %s23, 1
      %p54 = por %p52, %p53
      %p55 = scmp.ne.s32.totalorder %s47, %s50
      %p56 = scmp.eq.s32.totalorder %s23, 0
      %p57 = por %p55, %p56
      %p58 = scmp.ne.s32.totalorder %s47, %s50
      %p59 = scmp.eq.s32.totalorder %s28, 1
      %p60 = por %p58, %p59
      %p61 = scmp.ne.s32.totalorder %s50, %s51
      %p62 = scmp.eq.s32.totalorder %s28, 0
      %p63 = por %p61, %p62
      %p64 = scmp.ne.s32.totalorder %s50, %s51
      %p65 = scmp.eq.s32.totalorder %s29, 1
      %p66 = por %p64, %p65
      %p68 = scmp.ne.s32.totalorder %s51, %s67
      %p69 = scmp.eq.s32.totalorder %s29, 0
      %p70 = por %p68, %p69
      %s71 = ssub.s32 %s30, %s42
      %p72 = scmp.eq.s32.totalorder %s71, 0
      %s74 = sadd.s32 %s73, 1
      %s75 = scalar_select %p72, %s73, %s74
      %p78 = pneg %p72
      %p79 = scmp.eq.s32.totalorder %s23, 1
      %p80 = por %p78, %p79
      %p81 = scmp.ne.s32.totalorder %s73, %s76
      %p82 = scmp.eq.s32.totalorder %s23, 0
      %p83 = por %p81, %p82
      %p84 = scmp.ne.s32.totalorder %s73, %s76
      %p85 = scmp.eq.s32.totalorder %s28, 1
      %p86 = por %p84, %p85
      %p87 = scmp.ne.s32.totalorder %s76, %s77
      %p88 = scmp.eq.s32.totalorder %s28, 0
      %p89 = por %p87, %p88
      %p90 = scmp.ne.s32.totalorder %s76, %s77
      %p91 = scmp.eq.s32.totalorder %s29, 1
      %p92 = por %p90, %p91
      %p94 = scmp.ne.s32.totalorder %s77, %s93
      %p95 = scmp.eq.s32.totalorder %s29, 0
      %p96 = por %p94, %p95
      %s97 = ssub.s32 %s30, %s42
      %p98 = scmp.eq.s32.totalorder %s97, 0
      %s100 = sadd.s32 %s99, 1
      %s101 = scalar_select %p98, %s99, %s100
      %p104 = pneg %p98
      %p105 = scmp.eq.s32.totalorder %s23, 1
      %p106 = por %p104, %p105
      %p107 = scmp.ne.s32.totalorder %s99, %s102
      %p108 = scmp.eq.s32.totalorder %s23, 0
      %p109 = por %p107, %p108
      %p110 = scmp.ne.s32.totalorder %s99, %s102
      %p111 = scmp.eq.s32.totalorder %s28, 1
      %p112 = por %p110, %p111
      %p113 = scmp.ne.s32.totalorder %s102, %s103
      %p114 = scmp.eq.s32.totalorder %s28, 0
      %p115 = por %p113, %p114
      %p116 = scmp.ne.s32.totalorder %s102, %s103
      %p117 = scmp.eq.s32.totalorder %s29, 1
      %p118 = por %p116, %p117
      %p120 = scmp.ne.s32.totalorder %s103, %s119
      %p121 = scmp.eq.s32.totalorder %s29, 0
      %p122 = por %p120, %p121
      %s124 = sadd.s32 %s123, 1
      %p127 = scmp.eq.s32.totalorder %s23, 1
      %p128 = scmp.ne.s32.totalorder %s123, %s125
      %p129 = scmp.eq.s32.totalorder %s23, 0
      %p130 = por %p128, %p129
      %p131 = scmp.ne.s32.totalorder %s123, %s125
      %p132 = scmp.eq.s32.totalorder %s28, 1
      %p133 = por %p131, %p132
      %p134 = scmp.ne.s32.totalorder %s125, %s126
      %p135 = scmp.eq.s32.totalorder %s28, 0
      %p136 = por %p134, %p135
      %p137 = scmp.ne.s32.totalorder %s125, %s126
      %p138 = scmp.eq.s32.totalorder %s29, 1
      %p139 = por %p137, %p138
      %p141 = scmp.ne.s32.totalorder %s126, %s140
      %p142 = scmp.eq.s32.totalorder %s29, 0
      %p143 = por %p141, %p142
      %s145 = sadd.s32 %s144, 1
      %p148 = scmp.eq.s32.totalorder %s23, 1
      %p149 = scmp.ne.s32.totalorder %s144, %s146
      %p150 = scmp.eq.s32.totalorder %s23, 0
      %p151 = por %p149, %p150
      %p152 = scmp.ne.s32.totalorder %s144, %s146
      %p153 = scmp.eq.s32.totalorder %s28, 1
      %p154 = por %p152, %p153
      %p155 = scmp.ne.s32.totalorder %s146, %s147
      %p156 = scmp.eq.s32.totalorder %s28, 0
      %p157 = por %p155, %p156
      %p158 = scmp.ne.s32.totalorder %s146, %s147
      %p159 = scmp.eq.s32.totalorder %s29, 1
      %p160 = por %p158, %p159
      %p162 = scmp.ne.s32.totalorder %s147, %s161
      %p163 = scmp.eq.s32.totalorder %s29, 0
      %p164 = por %p162, %p163
      %s166 = sadd.s32 %s165, 1
      %p169 = scmp.eq.s32.totalorder %s23, 1
      %p170 = scmp.ne.s32.totalorder %s165, %s167
      %p171 = scmp.eq.s32.totalorder %s23, 0
      %p172 = por %p170, %p171
      %p173 = scmp.ne.s32.totalorder %s165, %s167
      %p174 = scmp.eq.s32.totalorder %s28, 1
      %p175 = por %p173, %p174
      %p176 = scmp.ne.s32.totalorder %s167, %s168
      %p177 = scmp.eq.s32.totalorder %s28, 0
      %p178 = por %p176, %p177
      %p179 = scmp.ne.s32.totalorder %s167, %s168
      %p180 = scmp.eq.s32.totalorder %s29, 1
      %p181 = por %p179, %p180
      %p183 = scmp.ne.s32.totalorder %s168, %s182
      %p184 = scmp.eq.s32.totalorder %s29, 0
      %p185 = por %p183, %p184
      %s186 = ssub.s32 %s30, %s42
      %s187 = ssub.s32 %s31, %s38
      %s188 = sor.u32 %s186, %s187
      %p189 = scmp.eq.s32.totalorder %s188, 0
      %s191 = sadd.s32 %s190, 1
      %s192 = scalar_select %p189, %s190, %s191
      %p195 = pneg %p189
      %p196 = scmp.eq.s32.totalorder %s23, 1
      %p197 = por %p195, %p196
      %p198 = scmp.ne.s32.totalorder %s190, %s193
      %p199 = scmp.eq.s32.totalorder %s23, 0
      %p200 = por %p198, %p199
      %p201 = scmp.ne.s32.totalorder %s190, %s193
      %p202 = scmp.eq.s32.totalorder %s28, 1
      %p203 = por %p201, %p202
      %p204 = scmp.ne.s32.totalorder %s193, %s194
      %p205 = scmp.eq.s32.totalorder %s28, 0
      %p206 = por %p204, %p205
      %p207 = scmp.ne.s32.totalorder %s193, %s194
      %p208 = scmp.eq.s32.totalorder %s29, 1
      %p209 = por %p207, %p208
      %p211 = scmp.ne.s32.totalorder %s194, %s210
      %p212 = scmp.eq.s32.totalorder %s29, 0
      %p213 = por %p211, %p212
      %p214 = scmp.le.s32.totalorder 1, %s23
      %p215 = scmp.lt.s32.totalorder %s23, 3
      %p216 = pnand %p214, %p215
      %p217 = pneg %p216
      // Predicated region
      $region9: #{tpu_custom_call.1} parent=5 // pred_check
        _
      $region10: #{tpu_custom_call.1} parent=5 // pred_check_branch
        %219 = sbr.rel (%p216) target = $region12
      $region11: #{tpu_custom_call.1} parent=5 // pred_region
        %s220 = ssub.s32 %s23, 1
        // Predicated region
        $region13: #{tpu_custom_call.1} parent=11 // pred_check
          %p221 = pneg %p136
        $region14: #{tpu_custom_call.1} parent=11 // pred_check_branch
          %223 = sbr.rel (%p221) target = $region16
        $region15: #{tpu_custom_call.1} parent=11 // pred_region
          %s225 = ssub.s32 512, 512
          %226 = vsyncadd [#allocation9], %s225
          %s227 = sshll.u32 [#allocation8], 4
          %s228 = int_to_ptr.vmem [resolvable:$true] %s227
          %233 = dma.hbm_to_vmem [thread:$0]  %s3, 512, %s228, [#allocation9], 128, 128, 8
        $region16: #{tpu_custom_call.1} parent=11 // pred_fallthru
          _
        // Predicated region
        $region17: #{tpu_custom_call.1} parent=11 // pred_check
          %p234 = pneg %p157
        $region18: #{tpu_custom_call.1} parent=11 // pred_check_branch
          %236 = sbr.rel (%p234) target = $region20
        $region19: #{tpu_custom_call.1} parent=11 // pred_region
          %s238 = ssub.s32 512, 512
          %239 = vsyncadd [#allocation9], %s238
          %s240 = sshll.u32 [#allocation10], 4
          %s241 = int_to_ptr.vmem [resolvable:$true] %s240
          %246 = dma.hbm_to_vmem [thread:$0]  %s4, 512, %s241, [#allocation9], 128, 128, 8
        $region20: #{tpu_custom_call.1} parent=11 // pred_fallthru
          _
        // Predicated region
        $region21: #{tpu_custom_call.1} parent=11 // pred_check
          %p247 = pneg %p178
        $region22: #{tpu_custom_call.1} parent=11 // pred_check_branch
          %249 = sbr.rel (%p247) target = $region24
        $region23: #{tpu_custom_call.1} parent=11 // pred_region
          %s251 = ssub.s32 16, 16
          %252 = vsyncadd [#allocation12], %s251
          %s254 = sshll.u32 [#allocation11], 4
          %s255 = int_to_ptr.vmem [resolvable:$true] %s254
          %257 = dma.hbm_to_vmem [thread:$0]  %s5, 16, %s255, [#allocation12]
        $region24: #{tpu_custom_call.1} parent=11 // pred_fallthru
          _
      $region12: #{tpu_custom_call.1} parent=5 // pred_fallthru
        _
      %p258 = scmp.lt.s32.totalorder %s23, 2
      // Predicated region
      $region25: #{tpu_custom_call.1} parent=5 // pred_check
        %p259 = pneg %p258
      $region26: #{tpu_custom_call.1} parent=5 // pred_check_branch
        %261 = sbr.rel (%p259) target = $region28
      $region27: #{tpu_custom_call.1} parent=5 // pred_region
        // Predicated region
        $region29: #{tpu_custom_call.1} parent=27 // pred_check
          %p262 = pneg %p57
        $region30: #{tpu_custom_call.1} parent=27 // pred_check_branch
          %264 = sbr.rel (%p262) target = $region32
        $region31: #{tpu_custom_call.1} parent=27 // pred_region
          %s265 = sand.u32 %s47, 1
          %s266 = scalar_lea.sflag [#allocation3], %s265
          %s267 = sand.u32 %s47, 1
          %s268 = smul.addr %s267, 16
          %s269 = scalar_lea.vmem [#allocation2], %s268
          %s270 = smul.u32 2, %s31
          %s272 = ssub.s32 256, 256
          %273 = vsyncadd %s266, %s272
          %s274 = smul.addr %s30, 2
          %s275 = sadd.s32 %s270, %s274
          %s276 = smul.addr %s275, 128
          %s277 = scalar_lea.hbm %s0, %s276
          %s278 = sshll.u32 %s269, 4
          %s279 = int_to_ptr.vmem [resolvable:$true] %s278
          %284 = dma.hbm_to_vmem [thread:$0]  %s277, 256, %s279, %s266, 128, 128, 8
        $region32: #{tpu_custom_call.1} parent=27 // pred_fallthru
          _
        // Predicated region
        $region33: #{tpu_custom_call.1} parent=27 // pred_check
          %p285 = pneg %p83
        $region34: #{tpu_custom_call.1} parent=27 // pred_check_branch
          %287 = sbr.rel (%p285) target = $region36
        $region35: #{tpu_custom_call.1} parent=27 // pred_region
          %s288 = sand.u32 %s23, 1
          %s289 = scalar_lea.sflag [#allocation6], %s288
          %s290 = sand.u32 %s73, 1
          %s291 = smul.addr %s290, 32
          %s292 = scalar_lea.vmem [#allocation5], %s291
          %s294 = ssub.s32 512, 512
          %295 = vsyncadd %s289, %s294
          %s296 = smul.addr %s30, 4
          %s297 = smul.addr %s296, 128
          %s298 = scalar_lea.hbm %s1, %s297
          %s299 = sshll.u32 %s292, 4
          %s300 = int_to_ptr.vmem [resolvable:$true] %s299
          %305 = dma.hbm_to_vmem [thread:$0]  %s298, 512, %s300, %s289, 128, 128, 8
        $region36: #{tpu_custom_call.1} parent=27 // pred_fallthru
          _
        // Predicated region
        $region37: #{tpu_custom_call.1} parent=27 // pred_check
          %p306 = pneg %p109
        $region38: #{tpu_custom_call.1} parent=27 // pred_check_branch
          %308 = sbr.rel (%p306) target = $region40
        $region39: #{tpu_custom_call.1} parent=27 // pred_region
          %s309 = sand.u32 %s23, 1
          %s310 = scalar_lea.sflag [#allocation6], %s309
          %s311 = sand.u32 %s99, 1
          %s312 = smul.addr %s311, 256
          %s313 = scalar_lea.vmem [#allocation7], %s312
          %s315 = ssub.s32 4096, 4096
          %316 = vsyncadd %s310, %s315
          %s317 = smul.addr %s30, 32
          %s318 = smul.addr %s317, 128
          %s319 = scalar_lea.hbm %s2, %s318
          %s320 = sshll.u32 %s313, 4
          %s321 = int_to_ptr.vmem [resolvable:$true] %s320
          %326 = dma.hbm_to_vmem [thread:$0]  %s319, 4096, %s321, %s310, 128, 128, 8
        $region40: #{tpu_custom_call.1} parent=27 // pred_fallthru
          _
      $region28: #{tpu_custom_call.1} parent=5 // pred_fallthru
        _
      %p327 = scmp.le.s32.totalorder 1, %s23
      %p328 = scmp.lt.s32.totalorder %s23, 3
      %p329 = pnand %p327, %p328
      %p330 = pneg %p329
      // Predicated region
      $region41: #{tpu_custom_call.1} parent=5 // pred_check
        _
      $region42: #{tpu_custom_call.1} parent=5 // pred_check_branch
        %332 = sbr.rel (%p329) target = $region44
      $region43: #{tpu_custom_call.1} parent=5 // pred_region
        %s333 = ssub.s32 %s23, 1
        %s334 = sand.u32 %s50, 1
        %s335 = scalar_lea.sflag [#allocation3], %s334
        %s336 = sand.u32 %s50, 1
        %s337 = smul.addr %s336, 16
        %s338 = scalar_lea.vmem [#allocation2], %s337
        // Predicated region
        $region45: #{tpu_custom_call.1} parent=43 // pred_check
          %p339 = pneg %p63
        $region46: #{tpu_custom_call.1} parent=43 // pred_check_branch
          %341 = sbr.rel (%p339) target = $region48
        $region47: #{tpu_custom_call.1} parent=43 // pred_region
          %342 = dma.done %s335, 256
        $region48: #{tpu_custom_call.1} parent=43 // pred_fallthru
          _
        %s343 = sand.u32 %s28, 1
        %s344 = scalar_lea.sflag [#allocation6], %s343
        %s345 = sand.u32 %s76, 1
        %s346 = smul.addr %s345, 32
        %s347 = scalar_lea.vmem [#allocation5], %s346
        // Predicated region
        $region49: #{tpu_custom_call.1} parent=43 // pred_check
          %p348 = pneg %p89
        $region50: #{tpu_custom_call.1} parent=43 // pred_check_branch
          %350 = sbr.rel (%p348) target = $region52
        $region51: #{tpu_custom_call.1} parent=43 // pred_region
          %351 = dma.done %s344, 512
        $region52: #{tpu_custom_call.1} parent=43 // pred_fallthru
          _
        %s352 = sand.u32 %s28, 1
        %s353 = scalar_lea.sflag [#allocation6], %s352
        %s354 = sand.u32 %s102, 1
        %s355 = smul.addr %s354, 256
        %s356 = scalar_lea.vmem [#allocation7], %s355
        // Predicated region
        $region53: #{tpu_custom_call.1} parent=43 // pred_check
          %p357 = pneg %p115
        $region54: #{tpu_custom_call.1} parent=43 // pred_check_branch
          %359 = sbr.rel (%p357) target = $region56
        $region55: #{tpu_custom_call.1} parent=43 // pred_region
          %360 = dma.done %s353, 4096
        $region56: #{tpu_custom_call.1} parent=43 // pred_fallthru
          _
        // Predicated region
        $region57: #{tpu_custom_call.1} parent=43 // pred_check
          %p361 = pneg %p136
        $region58: #{tpu_custom_call.1} parent=43 // pred_check_branch
          %363 = sbr.rel (%p361) target = $region60
        $region59: #{tpu_custom_call.1} parent=43 // pred_region
          %364 = dma.done [#allocation9], 512
        $region60: #{tpu_custom_call.1} parent=43 // pred_fallthru
          _
        // Predicated region
        $region61: #{tpu_custom_call.1} parent=43 // pred_check
          %p365 = pneg %p157
        $region62: #{tpu_custom_call.1} parent=43 // pred_check_branch
          %367 = sbr.rel (%p365) target = $region64
        $region63: #{tpu_custom_call.1} parent=43 // pred_region
          %368 = dma.done [#allocation9], 512
        $region64: #{tpu_custom_call.1} parent=43 // pred_fallthru
          _
        // Predicated region
        $region65: #{tpu_custom_call.1} parent=43 // pred_check
          %p369 = pneg %p178
        $region66: #{tpu_custom_call.1} parent=43 // pred_check_branch
          %371 = sbr.rel (%p369) target = $region68
        $region67: #{tpu_custom_call.1} parent=43 // pred_region
          %372 = dma.done [#allocation12], 16
        $region68: #{tpu_custom_call.1} parent=43 // pred_fallthru
          _
        %s373 = sand.u32 %s50, 1
        %s374 = scalar_lea.sflag [#allocation3], %s373
        %s375 = sand.u32 %s50, 1
        %s376 = smul.addr %s375, 16
        %s377 = scalar_lea.vmem [#allocation2], %s376
        %p378 = pneg %p63
        %p379 = pneg %p60
        %s380 = sand.u32 %s28, 1
        %s381 = scalar_lea.sflag [#allocation6], %s380
        %s382 = sand.u32 %s76, 1
        %s383 = smul.addr %s382, 32
        %s384 = scalar_lea.vmem [#allocation5], %s383
        %p385 = pneg %p89
        %p386 = pneg %p86
        %s387 = sand.u32 %s28, 1
        %s388 = scalar_lea.sflag [#allocation6], %s387
        %s389 = sand.u32 %s102, 1
        %s390 = smul.addr %s389, 256
        %s391 = scalar_lea.vmem [#allocation7], %s390
        %p392 = pneg %p115
        %p393 = pneg %p112
        %p394 = pneg %p136
        %p395 = pneg %p133
        %p396 = pneg %p157
        %p397 = pneg %p154
        %p398 = pneg %p178
        %p399 = pneg %p175
        %p400 = pneg %p206
        %p401 = pneg %p203
        %s402 = sand.u32 %s193, 1
        %s403 = scalar_lea.sflag [#allocation4], %s402
        %s404 = sand.u32 %s193, 1
        %s405 = smul.addr %s404, 16
        %s406 = scalar_lea.vmem [#allocation13], %s405
        %s407 = smul.u32 2, %s33
        %s408 = smul.u32 2, %s33
        %v409 = vld [vmem:[%s338] sm:$0xff]
        %v410 = vld [vmem:[%s338 + $0x8] sm:$0xff]
        %v411 = vld [vmem:[#allocation8] sm:$0xff]
        %v412 = vld [vmem:[#allocation8 + $0x8] sm:$0xff]
        %v413 = vld [vmem:[#allocation8 + $0x10] sm:$0xff]
        %v414 = vld [vmem:[#allocation8 + $0x18] sm:$0xff]
        %vm415 = vcmask 261120
        %v417 = vsel %vm415, %v409, 0
        %v420 = vsel %vm415, %v410, 0
        %422 = vmatprep.subr.mxu0 0.0
        %423 = vmatpush1.msra.mxu0 %v411
        %424 = vmatprep.subr.mxu0 0.0
        %425 = vmatpush1.msra.mxu0 %v412
        %426 = vmatprep.subr.mxu0 0.0
        %427 = vmatpush1.msra.mxu0 %v413
        %428 = vmatprep.subr.mxu0 0.0
        %429 = vmatpush1.msra.mxu0 %v414
        %430 = vmatprep.subr.mxu0 0.0
        %431 = vmatpush1.msra.mxu0 0.0
        %432 = vmatprep.subr.mxu0 0.0
        %433 = vmatpush1.msra.mxu0 0.0
        %434 = vmatprep.subr.mxu0 0.0
        %435 = vmatpush1.msra.mxu0 0.0
        %436 = vmatprep.subr.mxu0 0.0
        %437 = vmatpush1.msra.mxu0 0.0
        %438 = vmatprep.subr.mxu0 0.0
        %439 = vmatpush1.msra.mxu0 0.0
        %440 = vmatprep.subr.mxu0 0.0
        %441 = vmatpush1.msra.mxu0 0.0
        %442 = vmatprep.subr.mxu0 0.0
        %443 = vmatpush1.msra.mxu0 0.0
        %444 = vmatprep.subr.mxu0 0.0
        %445 = vmatpush1.msra.mxu0 0.0
        %446 = vmatprep.subr.mxu0 0.0
        %447 = vmatpush1.msra.mxu0 0.0
        %448 = vmatprep.subr.mxu0 0.0
        %449 = vmatpush1.msra.mxu0 0.0
        %450 = vmatprep.subr.mxu0 0.0
        %451 = vmatpush1.msra.mxu0 0.0
        %452 = vmatprep.subr.mxu0 0.0
        %453 = vmatpush1.msra.mxu0 0.0
        %454 = vmatprep.subr.mxu0 0.0
        %455 = vmatpush1.msra.mxu0 0.0
        %456 = vmatprep.subr.mxu0 0.0
        %457 = vmatpush1.msra.mxu0 0.0
        %458 = vmatprep.subr.mxu0 0.0
        %459 = vmatpush1.msra.mxu0 0.0
        %460 = vmatprep.subr.mxu0 0.0
        %461 = vmatpush1.msra.mxu0 0.0
        %462 = vmatprep.subr.mxu0 0.0
        %463 = vmatpush1.msra.mxu0 0.0
        %464 = vmatprep.subr.mxu0 0.0
        %465 = vmatpush1.msra.mxu0 0.0
        %466 = vmatprep.subr.mxu0 0.0
        %467 = vmatpush1.msra.mxu0 0.0
        %468 = vmatprep.subr.mxu0 0.0
        %469 = vmatpush1.msra.mxu0 0.0
        %470 = vmatprep.subr.mxu0 0.0
        %471 = vmatpush1.msra.mxu0 0.0
        %472 = vmatprep.subr.mxu0 0.0
        %473 = vmatpush1.msra.mxu0 0.0
        %474 = vmatprep.subr.mxu0 0.0
        %475 = vmatpush1.msra.mxu0 0.0
        %476 = vmatprep.subr.mxu0 0.0
        %477 = vmatpush1.msra.mxu0 0.0
        %478 = vmatprep.subr.mxu0 0.0
        %479 = vmatpush1.msra.mxu0 0.0
        %480 = vmatprep.subr.mxu0 0.0
        %481 = vmatpush1.msra.mxu0 0.0
        %482 = vmatprep.subr.mxu0 0.0
        %483 = vmatpush1.msra.mxu0 0.0
        %484 = vmatprep.subr.mxu0 0.0
        %485 = vmatpush1.msra.mxu0 0.0
        %486 = vmatprep.mubr.f32.mxu0 0.0
        %487 = vmatmul.mubr.f32.gmra.mrb[0].mxu0 %v417
        %v488 = vpop.f32.mrb[0].mxu0
        %v489 = vadd.f32 0.0, %v488
        %v490 = vpop.f32.mrb[0].mxu0
        %491 = vmatprep.mubr.f32.mxu0 0.0
        %492 = vmatmul.mubr.f32.gmra.mrb[0].mxu0 %v420
        %v493 = vpop.f32.mrb[0].mxu0
        %v494 = vadd.f32 0.0, %v493
        %v495 = vpop.f32.mrb[0].mxu0
        %496 = vdwg.mxu0
        %v497 = vld [vmem:[%s347] sm:$0xff]
        %v498 = vld [vmem:[%s347 + $0x8] sm:$0xff]
        %v499 = vld [vmem:[%s356] sm:$0xff]
        %v500 = vld [vmem:[%s356 + $0x8] sm:$0xff]
        %v501 = vld [vmem:[%s356 + $0x10] sm:$0xff]
        %v502 = vld [vmem:[%s356 + $0x18] sm:$0xff]
        %v503 = vld [vmem:[%s356 + $0x20] sm:$0xff]
        %v504 = vld [vmem:[%s356 + $0x28] sm:$0xff]
        %v505 = vld [vmem:[%s356 + $0x30] sm:$0xff]
        %v506 = vld [vmem:[%s356 + $0x38] sm:$0xff]
        %v507 = vld [vmem:[%s356 + $0x40] sm:$0xff]
        %v508 = vld [vmem:[%s356 + $0x48] sm:$0xff]
        %v509 = vld [vmem:[%s356 + $0x50] sm:$0xff]
        %v510 = vld [vmem:[%s356 + $0x58] sm:$0xff]
        %v511 = vld [vmem:[%s356 + $0x60] sm:$0xff]
        %v512 = vld [vmem:[%s356 + $0x68] sm:$0xff]
        %v513 = vld [vmem:[%s356 + $0x70] sm:$0xff]
        %v514 = vld [vmem:[%s356 + $0x78] sm:$0xff]
        %vm515 = vcmask 130048
        %v517 = vsel %vm515, %v489, 0
        %v520 = vsel %vm515, %v494, 0
        %522 = vmatprep.subr.mxu0 0.0
        %523 = vmatpush1.msra.mxu0 %v497
        %524 = vmatprep.subr.mxu0 0.0
        %525 = vmatpush1.msra.mxu0 %v498
        %526 = vmatprep.subr.mxu0 0.0
        %527 = vmatpush1.msra.mxu0 0.0
        %528 = vmatprep.subr.mxu0 0.0
        %529 = vmatpush1.msra.mxu0 0.0
        %530 = vmatprep.subr.mxu0 0.0
        %531 = vmatpush1.msra.mxu0 0.0
        %532 = vmatprep.subr.mxu0 0.0
        %533 = vmatpush1.msra.mxu0 0.0
        %534 = vmatprep.subr.mxu0 0.0
        %535 = vmatpush1.msra.mxu0 0.0
        %536 = vmatprep.subr.mxu0 0.0
        %537 = vmatpush1.msra.mxu0 0.0
        %538 = vmatprep.subr.mxu0 0.0
        %539 = vmatpush1.msra.mxu0 0.0
        %540 = vmatprep.subr.mxu0 0.0
        %541 = vmatpush1.msra.mxu0 0.0
        %542 = vmatprep.subr.mxu0 0.0
        %543 = vmatpush1.msra.mxu0 0.0
        %544 = vmatprep.subr.mxu0 0.0
        %545 = vmatpush1.msra.mxu0 0.0
        %546 = vmatprep.subr.mxu0 0.0
        %547 = vmatpush1.msra.mxu0 0.0
        %548 = vmatprep.subr.mxu0 0.0
        %549 = vmatpush1.msra.mxu0 0.0
        %550 = vmatprep.subr.mxu0 0.0
        %551 = vmatpush1.msra.mxu0 0.0
        %552 = vmatprep.subr.mxu0 0.0
        %553 = vmatpush1.msra.mxu0 0.0
        %554 = vmatprep.subr.mxu0 0.0
        %555 = vmatpush1.msra.mxu0 0.0
        %556 = vmatprep.subr.mxu0 0.0
        %557 = vmatpush1.msra.mxu0 0.0
        %558 = vmatprep.subr.mxu0 0.0
        %559 = vmatpush1.msra.mxu0 0.0
        %560 = vmatprep.subr.mxu0 0.0
        %561 = vmatpush1.msra.mxu0 0.0
        %562 = vmatprep.subr.mxu0 0.0
        %563 = vmatpush1.msra.mxu0 0.0
        %564 = vmatprep.subr.mxu0 0.0
        %565 = vmatpush1.msra.mxu0 0.0
        %566 = vmatprep.subr.mxu0 0.0
        %567 = vmatpush1.msra.mxu0 0.0
        %568 = vmatprep.subr.mxu0 0.0
        %569 = vmatpush1.msra.mxu0 0.0
        %570 = vmatprep.subr.mxu0 0.0
        %571 = vmatpush1.msra.mxu0 0.0
        %572 = vmatprep.subr.mxu0 0.0
        %573 = vmatpush1.msra.mxu0 0.0
        %574 = vmatprep.subr.mxu0 0.0
        %575 = vmatpush1.msra.mxu0 0.0
        %576 = vmatprep.subr.mxu0 0.0
        %577 = vmatpush1.msra.mxu0 0.0
        %578 = vmatprep.subr.mxu0 0.0
        %579 = vmatpush1.msra.mxu0 0.0
        %580 = vmatprep.subr.mxu0 0.0
        %581 = vmatpush1.msra.mxu0 0.0
        %582 = vmatprep.subr.mxu0 0.0
        %583 = vmatpush1.msra.mxu0 0.0
        %584 = vmatprep.subr.mxu0 0.0
        %585 = vmatpush1.msra.mxu0 0.0
        %586 = vmatprep.mubr.f32.mxu0 0.0
        %587 = vmatmul.mubr.f32.gmra.mrb[0].mxu0 %v517
        %v588 = vpop.f32.mrb[0].mxu0
        %v589 = vadd.f32 0.0, %v588
        %v590 = vpop.f32.mrb[0].mxu0
        %591 = vmatprep.mubr.f32.mxu0 0.0
        %592 = vmatmul.mubr.f32.gmra.mrb[0].mxu0 %v520
        %v593 = vpop.f32.mrb[0].mxu0
        %v594 = vadd.f32 0.0, %v593
        %v595 = vpop.f32.mrb[0].mxu0
        %596 = vdwg.mxu0
        %597 = vmax.xlane.f32.xlu0 %v589
        %v598 = vpop.xlane.xlu0 %597
        %599 = vmax.xlane.f32.xlu0 %v594
        %v600 = vpop.xlane.xlu0 %599
        %v601 = vsub.f32 %v589, %v598
        %v602 = vsub.f32 %v594, %v600
        %v603 = vmul.f32 %v601, 1.442695
        %v604 = vpow.pop %v603
        %v605 = vmul.f32 %v602, 1.442695
        %v606 = vpow.pop %v605
        %607 = vadd.xlane.f32.xlu0 %v604
        %v608 = vpop.xlane.xlu0 %607
        %609 = vadd.xlane.f32.xlu0 %v606
        %v610 = vpop.xlane.xlu0 %609
        %v611 = vsub.f32 0.0, %v598
        %v612 = vsub.f32 0.0, %v600
        %v613 = vmul.f32 %v611, 1.442695
        %v614 = vpow.pop %v613
        %v615 = vmul.f32 %v612, 1.442695
        %v616 = vpow.pop %v615
        %v617 = vmul.f32 %v614, 120.0
        %v618 = vmul.f32 %v616, 120.0
        %v619 = vsub.f32 %v608, %v617
        %v620 = vsub.f32 %v610, %v618
        %621 = vmatprep.subr.mxu0 0.0
        %622 = vmatpush1.msra.mxu0 %v499
        %623 = vmatprep.subr.mxu0 0.0
        %624 = vmatpush1.msra.mxu0 %v500
        %625 = vmatprep.subr.mxu0 0.0
        %626 = vmatpush1.msra.mxu0 %v501
        %627 = vmatprep.subr.mxu0 0.0
        %628 = vmatpush1.msra.mxu0 %v502
        %629 = vmatprep.subr.mxu0 0.0
        %630 = vmatpush1.msra.mxu0 %v503
        %631 = vmatprep.subr.mxu0 0.0
        %632 = vmatpush1.msra.mxu0 %v504
        %633 = vmatprep.subr.mxu0 0.0
        %634 = vmatpush1.msra.mxu0 %v505
        %635 = vmatprep.subr.mxu0 0.0
        %636 = vmatpush1.msra.mxu0 %v506
        %637 = vmatprep.subr.mxu0 0.0
        %638 = vmatpush1.msra.mxu0 %v507
        %639 = vmatprep.subr.mxu0 0.0
        %640 = vmatpush1.msra.mxu0 %v508
        %641 = vmatprep.subr.mxu0 0.0
        %642 = vmatpush1.msra.mxu0 %v509
        %643 = vmatprep.subr.mxu0 0.0
        %644 = vmatpush1.msra.mxu0 %v510
        %645 = vmatprep.subr.mxu0 0.0
        %646 = vmatpush1.msra.mxu0 %v511
        %647 = vmatprep.subr.mxu0 0.0
        %648 = vmatpush1.msra.mxu0 %v512
        %649 = vmatprep.subr.mxu0 0.0
        %650 = vmatpush1.msra.mxu0 %v513
        %651 = vmatprep.subr.mxu0 0.0
        %652 = vmatpush1.msra.mxu0 %v514
        %653 = vmatprep.subr.mxu0 0.0
        %654 = vmatpush1.msra.mxu0 0.0
        %655 = vmatprep.subr.mxu0 0.0
        %656 = vmatpush1.msra.mxu0 0.0
        %657 = vmatprep.subr.mxu0 0.0
        %658 = vmatpush1.msra.mxu0 0.0
        %659 = vmatprep.subr.mxu0 0.0
        %660 = vmatpush1.msra.mxu0 0.0
        %661 = vmatprep.subr.mxu0 0.0
        %662 = vmatpush1.msra.mxu0 0.0
        %663 = vmatprep.subr.mxu0 0.0
        %664 = vmatpush1.msra.mxu0 0.0
        %665 = vmatprep.subr.mxu0 0.0
        %666 = vmatpush1.msra.mxu0 0.0
        %667 = vmatprep.subr.mxu0 0.0
        %668 = vmatpush1.msra.mxu0 0.0
        %669 = vmatprep.subr.mxu0 0.0
        %670 = vmatpush1.msra.mxu0 0.0
        %671 = vmatprep.subr.mxu0 0.0
        %672 = vmatpush1.msra.mxu0 0.0
        %673 = vmatprep.subr.mxu0 0.0
        %674 = vmatpush1.msra.mxu0 0.0
        %675 = vmatprep.subr.mxu0 0.0
        %676 = vmatpush1.msra.mxu0 0.0
        %677 = vmatprep.subr.mxu0 0.0
        %678 = vmatpush1.msra.mxu0 0.0
        %679 = vmatprep.subr.mxu0 0.0
        %680 = vmatpush1.msra.mxu0 0.0
        %681 = vmatprep.subr.mxu0 0.0
        %682 = vmatpush1.msra.mxu0 0.0
        %683 = vmatprep.subr.mxu0 0.0
        %684 = vmatpush1.msra.mxu0 0.0
        %685 = vmatprep.mubr.f32.mxu0 0.0
        %686 = vmatmul.mubr.f32.gmra.mrb[0].mxu0 %v604
        %v687 = vpop.f32.mrb[0].mxu0
        %v688 = vadd.f32 0.0, %v687
        %v689 = vpop.f32.mrb[0].mxu0
        %690 = vmatprep.mubr.f32.mxu0 0.0
        %691 = vmatmul.mubr.f32.gmra.mrb[0].mxu0 %v606
        %v692 = vpop.f32.mrb[0].mxu0
        %v693 = vadd.f32 0.0, %v692
        %v694 = vpop.f32.mrb[0].mxu0
        %695 = vdwg.mxu0
        %v696 = vrcp.pop %v619
        %v697 = vrcp.pop %v620
        %v698 = vmul.f32 %v688, %v696
        %v699 = vmul.f32 %v693, %v697
        %v700 = vld [vmem:[#allocation10] sm:$0xff]
        %v701 = vld [vmem:[#allocation10 + $0x8] sm:$0xff]
        %s702 = scalar_lea.vmem %s347, 16 [#allocation5]
        %v703 = vld [vmem:[%s702] sm:$0xff]
        %v704 = vld [vmem:[%s702 + $0x8] sm:$0xff]
        %s705 = scalar_lea.vmem %s356, 128 [#allocation7]
        %v706 = vld [vmem:[%s705] sm:$0xff]
        %v707 = vld [vmem:[%s705 + $0x8] sm:$0xff]
        %v708 = vld [vmem:[%s705 + $0x10] sm:$0xff]
        %v709 = vld [vmem:[%s705 + $0x18] sm:$0xff]
        %v710 = vld [vmem:[%s705 + $0x20] sm:$0xff]
        %v711 = vld [vmem:[%s705 + $0x28] sm:$0xff]
        %v712 = vld [vmem:[%s705 + $0x30] sm:$0xff]
        %v713 = vld [vmem:[%s705 + $0x38] sm:$0xff]
        %v714 = vld [vmem:[%s705 + $0x40] sm:$0xff]
        %v715 = vld [vmem:[%s705 + $0x48] sm:$0xff]
        %v716 = vld [vmem:[%s705 + $0x50] sm:$0xff]
        %v717 = vld [vmem:[%s705 + $0x58] sm:$0xff]
        %v718 = vld [vmem:[%s705 + $0x60] sm:$0xff]
        %v719 = vld [vmem:[%s705 + $0x68] sm:$0xff]
        %v720 = vld [vmem:[%s705 + $0x70] sm:$0xff]
        %v721 = vld [vmem:[%s705 + $0x78] sm:$0xff]
        %722 = vrot.lane.b32.xlu0 %v489, 112
        %v723 = vpop.permute.xlu0 %722
        %724 = vrot.lane.b32.xlu0 %v494, 112
        %v725 = vpop.permute.xlu0 %724
        %v726 = vsel %vm515, %v723, 0
        %v728 = vsel %vm515, %v725, 0
        %730 = vmatprep.subr.mxu0 0.0
        %731 = vmatpush1.msra.mxu0 %v703
        %732 = vmatprep.subr.mxu0 0.0
        %733 = vmatpush1.msra.mxu0 %v704
        %734 = vmatprep.subr.mxu0 0.0
        %735 = vmatpush1.msra.mxu0 0.0
        %736 = vmatprep.subr.mxu0 0.0
        %737 = vmatpush1.msra.mxu0 0.0
        %738 = vmatprep.subr.mxu0 0.0
        %739 = vmatpush1.msra.mxu0 0.0
        %740 = vmatprep.subr.mxu0 0.0
        %741 = vmatpush1.msra.mxu0 0.0
        %742 = vmatprep.subr.mxu0 0.0
        %743 = vmatpush1.msra.mxu0 0.0
        %744 = vmatprep.subr.mxu0 0.0
        %745 = vmatpush1.msra.mxu0 0.0
        %746 = vmatprep.subr.mxu0 0.0
        %747 = vmatpush1.msra.mxu0 0.0
        %748 = vmatprep.subr.mxu0 0.0
        %749 = vmatpush1.msra.mxu0 0.0
        %750 = vmatprep.subr.mxu0 0.0
        %751 = vmatpush1.msra.mxu0 0.0
        %752 = vmatprep.subr.mxu0 0.0
        %753 = vmatpush1.msra.mxu0 0.0
        %754 = vmatprep.subr.mxu0 0.0
        %755 = vmatpush1.msra.mxu0 0.0
        %756 = vmatprep.subr.mxu0 0.0
        %757 = vmatpush1.msra.mxu0 0.0
        %758 = vmatprep.subr.mxu0 0.0
        %759 = vmatpush1.msra.mxu0 0.0
        %760 = vmatprep.subr.mxu0 0.0
        %761 = vmatpush1.msra.mxu0 0.0
        %762 = vmatprep.subr.mxu0 0.0
        %763 = vmatpush1.msra.mxu0 0.0
        %764 = vmatprep.subr.mxu0 0.0
        %765 = vmatpush1.msra.mxu0 0.0
        %766 = vmatprep.subr.mxu0 0.0
        %767 = vmatpush1.msra.mxu0 0.0
        %768 = vmatprep.subr.mxu0 0.0
        %769 = vmatpush1.msra.mxu0 0.0
        %770 = vmatprep.subr.mxu0 0.0
        %771 = vmatpush1.msra.mxu0 0.0
        %772 = vmatprep.subr.mxu0 0.0
        %773 = vmatpush1.msra.mxu0 0.0
        %774 = vmatprep.subr.mxu0 0.0
        %775 = vmatpush1.msra.mxu0 0.0
        %776 = vmatprep.subr.mxu0 0.0
        %777 = vmatpush1.msra.mxu0 0.0
        %778 = vmatprep.subr.mxu0 0.0
        %779 = vmatpush1.msra.mxu0 0.0
        %780 = vmatprep.subr.mxu0 0.0
        %781 = vmatpush1.msra.mxu0 0.0
        %782 = vmatprep.subr.mxu0 0.0
        %783 = vmatpush1.msra.mxu0 0.0
        %784 = vmatprep.subr.mxu0 0.0
        %785 = vmatpush1.msra.mxu0 0.0
        %786 = vmatprep.subr.mxu0 0.0
        %787 = vmatpush1.msra.mxu0 0.0
        %788 = vmatprep.subr.mxu0 0.0
        %789 = vmatpush1.msra.mxu0 0.0
        %790 = vmatprep.subr.mxu0 0.0
        %791 = vmatpush1.msra.mxu0 0.0
        %792 = vmatprep.subr.mxu0 0.0
        %793 = vmatpush1.msra.mxu0 0.0
        %794 = vmatprep.mubr.f32.mxu0 0.0
        %795 = vmatmul.mubr.f32.gmra.mrb[0].mxu0 %v726
        %v796 = vpop.f32.mrb[0].mxu0
        %v797 = vadd.f32 0.0, %v796
        %v798 = vpop.f32.mrb[0].mxu0
        %799 = vmatprep.mubr.f32.mxu0 0.0
        %800 = vmatmul.mubr.f32.gmra.mrb[0].mxu0 %v728
        %v801 = vpop.f32.mrb[0].mxu0
        %v802 = vadd.f32 0.0, %v801
        %v803 = vpop.f32.mrb[0].mxu0
        %804 = vdwg.mxu0
        %805 = vmax.xlane.f32.xlu0 %v797
        %v806 = vpop.xlane.xlu0 %805
        %807 = vmax.xlane.f32.xlu0 %v802
        %v808 = vpop.xlane.xlu0 %807
        %v809 = vsub.f32 %v797, %v806
        %v810 = vsub.f32 %v802, %v808
        %v811 = vmul.f32 %v809, 1.442695
        %v812 = vpow.pop %v811
        %v813 = vmul.f32 %v810, 1.442695
        %v814 = vpow.pop %v813
        %815 = vadd.xlane.f32.xlu0 %v812
        %v816 = vpop.xlane.xlu0 %815
        %817 = vadd.xlane.f32.xlu0 %v814
        %v818 = vpop.xlane.xlu0 %817
        %v819 = vsub.f32 0.0, %v806
        %v820 = vsub.f32 0.0, %v808
        %v821 = vmul.f32 %v819, 1.442695
        %v822 = vpow.pop %v821
        %v823 = vmul.f32 %v820, 1.442695
        %v824 = vpow.pop %v823
        %v825 = vmul.f32 %v822, 120.0
        %v826 = vmul.f32 %v824, 120.0
        %v827 = vsub.f32 %v816, %v825
        %v828 = vsub.f32 %v818, %v826
        %829 = vmatprep.subr.mxu0 0.0
        %830 = vmatpush1.msra.mxu0 %v706
        %831 = vmatprep.subr.mxu0 0.0
        %832 = vmatpush1.msra.mxu0 %v707
        %833 = vmatprep.subr.mxu0 0.0
        %834 = vmatpush1.msra.mxu0 %v708
        %835 = vmatprep.subr.mxu0 0.0
        %836 = vmatpush1.msra.mxu0 %v709
        %837 = vmatprep.subr.mxu0 0.0
        %838 = vmatpush1.msra.mxu0 %v710
        %839 = vmatprep.subr.mxu0 0.0
        %840 = vmatpush1.msra.mxu0 %v711
        %841 = vmatprep.subr.mxu0 0.0
        %842 = vmatpush1.msra.mxu0 %v712
        %843 = vmatprep.subr.mxu0 0.0
        %844 = vmatpush1.msra.mxu0 %v713
        %845 = vmatprep.subr.mxu0 0.0
        %846 = vmatpush1.msra.mxu0 %v714
        %847 = vmatprep.subr.mxu0 0.0
        %848 = vmatpush1.msra.mxu0 %v715
        %849 = vmatprep.subr.mxu0 0.0
        %850 = vmatpush1.msra.mxu0 %v716
        %851 = vmatprep.subr.mxu0 0.0
        %852 = vmatpush1.msra.mxu0 %v717
        %853 = vmatprep.subr.mxu0 0.0
        %854 = vmatpush1.msra.mxu0 %v718
        %855 = vmatprep.subr.mxu0 0.0
        %856 = vmatpush1.msra.mxu0 %v719
        %857 = vmatprep.subr.mxu0 0.0
        %858 = vmatpush1.msra.mxu0 %v720
        %859 = vmatprep.subr.mxu0 0.0
        %860 = vmatpush1.msra.mxu0 %v721
        %861 = vmatprep.subr.mxu0 0.0
        %862 = vmatpush1.msra.mxu0 0.0
        %863 = vmatprep.subr.mxu0 0.0
        %864 = vmatpush1.msra.mxu0 0.0
        %865 = vmatprep.subr.mxu0 0.0
        %866 = vmatpush1.msra.mxu0 0.0
        %867 = vmatprep.subr.mxu0 0.0
        %868 = vmatpush1.msra.mxu0 0.0
        %869 = vmatprep.subr.mxu0 0.0
        %870 = vmatpush1.msra.mxu0 0.0
        %871 = vmatprep.subr.mxu0 0.0
        %872 = vmatpush1.msra.mxu0 0.0
        %873 = vmatprep.subr.mxu0 0.0
        %874 = vmatpush1.msra.mxu0 0.0
        %875 = vmatprep.subr.mxu0 0.0
        %876 = vmatpush1.msra.mxu0 0.0
        %877 = vmatprep.subr.mxu0 0.0
        %878 = vmatpush1.msra.mxu0 0.0
        %879 = vmatprep.subr.mxu0 0.0
        %880 = vmatpush1.msra.mxu0 0.0
        %881 = vmatprep.subr.mxu0 0.0
        %882 = vmatpush1.msra.mxu0 0.0
        %883 = vmatprep.subr.mxu0 0.0
        %884 = vmatpush1.msra.mxu0 0.0
        %885 = vmatprep.subr.mxu0 0.0
        %886 = vmatpush1.msra.mxu0 0.0
        %887 = vmatprep.subr.mxu0 0.0
        %888 = vmatpush1.msra.mxu0 0.0
        %889 = vmatprep.subr.mxu0 0.0
        %890 = vmatpush1.msra.mxu0 0.0
        %891 = vmatprep.subr.mxu0 0.0
        %892 = vmatpush1.msra.mxu0 0.0
        %893 = vmatprep.mubr.f32.mxu0 0.0
        %894 = vmatmul.mubr.f32.gmra.mrb[0].mxu0 %v812
        %v895 = vpop.f32.mrb[0].mxu0
        %v896 = vadd.f32 0.0, %v895
        %v897 = vpop.f32.mrb[0].mxu0
        %898 = vmatprep.mubr.f32.mxu0 0.0
        %899 = vmatmul.mubr.f32.gmra.mrb[0].mxu0 %v814
        %v900 = vpop.f32.mrb[0].mxu0
        %v901 = vadd.f32 0.0, %v900
        %v902 = vpop.f32.mrb[0].mxu0
        %903 = vdwg.mxu0
        %v904 = vrcp.pop %v827
        %v905 = vrcp.pop %v828
        %v906 = vmul.f32 %v896, %v904
        %v907 = vmul.f32 %v901, %v905
        %s908 = scalar_lea.vmem [#allocation10], 16
        %v909 = vld [vmem:[%s908] sm:$0xff]
        %v910 = vld [vmem:[%s908 + $0x8] sm:$0xff]
        %v912 = vsel %vm515, %v906, 0
        %v915 = vsel %vm515, %v907, 0
        %917 = vmatprep.subr.mxu0 0.0
        %918 = vmatpush1.msra.mxu0 %v909
        %919 = vmatprep.subr.mxu0 0.0
        %920 = vmatpush1.msra.mxu0 %v910
        %921 = vmatprep.subr.mxu0 0.0
        %922 = vmatpush1.msra.mxu0 0.0
        %923 = vmatprep.subr.mxu0 0.0
        %924 = vmatpush1.msra.mxu0 0.0
        %925 = vmatprep.subr.mxu0 0.0
        %926 = vmatpush1.msra.mxu0 0.0
        %927 = vmatprep.subr.mxu0 0.0
        %928 = vmatpush1.msra.mxu0 0.0
        %929 = vmatprep.subr.mxu0 0.0
        %930 = vmatpush1.msra.mxu0 0.0
        %931 = vmatprep.subr.mxu0 0.0
        %932 = vmatpush1.msra.mxu0 0.0
        %933 = vmatprep.subr.mxu0 0.0
        %934 = vmatpush1.msra.mxu0 0.0
        %935 = vmatprep.subr.mxu0 0.0
        %936 = vmatpush1.msra.mxu0 0.0
        %937 = vmatprep.subr.mxu0 0.0
        %938 = vmatpush1.msra.mxu0 0.0
        %939 = vmatprep.subr.mxu0 0.0
        %940 = vmatpush1.msra.mxu0 0.0
        %941 = vmatprep.subr.mxu0 0.0
        %942 = vmatpush1.msra.mxu0 0.0
        %943 = vmatprep.subr.mxu0 0.0
        %944 = vmatpush1.msra.mxu0 0.0
        %945 = vmatprep.subr.mxu0 0.0
        %946 = vmatpush1.msra.mxu0 0.0
        %947 = vmatprep.subr.mxu0 0.0
        %948 = vmatpush1.msra.mxu0 0.0
        %949 = vmatprep.subr.mxu0 0.0
        %950 = vmatpush1.msra.mxu0 0.0
        %951 = vmatprep.subr.mxu0 0.0
        %952 = vmatpush1.msra.mxu0 0.0
        %953 = vmatprep.subr.mxu0 0.0
        %954 = vmatpush1.msra.mxu0 0.0
        %955 = vmatprep.subr.mxu0 0.0
        %956 = vmatpush1.msra.mxu0 0.0
        %957 = vmatprep.subr.mxu0 0.0
        %958 = vmatpush1.msra.mxu0 0.0
        %959 = vmatprep.subr.mxu0 0.0
        %960 = vmatpush1.msra.mxu0 0.0
        %961 = vmatprep.subr.mxu0 0.0
        %962 = vmatpush1.msra.mxu0 0.0
        %963 = vmatprep.subr.mxu0 0.0
        %964 = vmatpush1.msra.mxu0 0.0
        %965 = vmatprep.subr.mxu0 0.0
        %966 = vmatpush1.msra.mxu0 0.0
        %967 = vmatprep.subr.mxu0 0.0
        %968 = vmatpush1.msra.mxu0 0.0
        %969 = vmatprep.subr.mxu0 0.0
        %970 = vmatpush1.msra.mxu0 0.0
        %971 = vmatprep.subr.mxu0 0.0
        %972 = vmatpush1.msra.mxu0 0.0
        %973 = vmatprep.subr.mxu0 0.0
        %974 = vmatpush1.msra.mxu0 0.0
        %975 = vmatprep.subr.mxu0 0.0
        %976 = vmatpush1.msra.mxu0 0.0
        %977 = vmatprep.subr.mxu0 0.0
        %978 = vmatpush1.msra.mxu0 0.0
        %979 = vmatprep.subr.mxu0 0.0
        %980 = vmatpush1.msra.mxu0 0.0
        %981 = vmatprep.mubr.f32.mxu0 0.0
        %982 = vmatmul.mubr.f32.gmra.mrb[0].mxu0 %v912
        %v983 = vpop.f32.mrb[0].mxu0
        %v984 = vadd.f32 0.0, %v983
        %v985 = vpop.f32.mrb[0].mxu0
        %986 = vmatprep.mubr.f32.mxu0 0.0
        %987 = vmatmul.mubr.f32.gmra.mrb[0].mxu0 %v915
        %v988 = vpop.f32.mrb[0].mxu0
        %v989 = vadd.f32 0.0, %v988
        %v990 = vpop.f32.mrb[0].mxu0
        %991 = vdwg.mxu0
        %v993 = vsel %vm515, %v698, 0
        %v996 = vsel %vm515, %v699, 0
        %998 = vmatprep.subr.mxu0 0.0
        %999 = vmatpush1.msra.mxu0 %v700
        %1000 = vmatprep.subr.mxu0 0.0
        %1001 = vmatpush1.msra.mxu0 %v701
        %1002 = vmatprep.subr.mxu0 0.0
        %1003 = vmatpush1.msra.mxu0 0.0
        %1004 = vmatprep.subr.mxu0 0.0
        %1005 = vmatpush1.msra.mxu0 0.0
        %1006 = vmatprep.subr.mxu0 0.0
        %1007 = vmatpush1.msra.mxu0 0.0
        %1008 = vmatprep.subr.mxu0 0.0
        %1009 = vmatpush1.msra.mxu0 0.0
        %1010 = vmatprep.subr.mxu0 0.0
        %1011 = vmatpush1.msra.mxu0 0.0
        %1012 = vmatprep.subr.mxu0 0.0
        %1013 = vmatpush1.msra.mxu0 0.0
        %1014 = vmatprep.subr.mxu0 0.0
        %1015 = vmatpush1.msra.mxu0 0.0
        %1016 = vmatprep.subr.mxu0 0.0
        %1017 = vmatpush1.msra.mxu0 0.0
        %1018 = vmatprep.subr.mxu0 0.0
        %1019 = vmatpush1.msra.mxu0 0.0
        %1020 = vmatprep.subr.mxu0 0.0
        %1021 = vmatpush1.msra.mxu0 0.0
        %1022 = vmatprep.subr.mxu0 0.0
        %1023 = vmatpush1.msra.mxu0 0.0
        %1024 = vmatprep.subr.mxu0 0.0
        %1025 = vmatpush1.msra.mxu0 0.0
        %1026 = vmatprep.subr.mxu0 0.0
        %1027 = vmatpush1.msra.mxu0 0.0
        %1028 = vmatprep.subr.mxu0 0.0
        %1029 = vmatpush1.msra.mxu0 0.0
        %1030 = vmatprep.subr.mxu0 0.0
        %1031 = vmatpush1.msra.mxu0 0.0
        %1032 = vmatprep.subr.mxu0 0.0
        %1033 = vmatpush1.msra.mxu0 0.0
        %1034 = vmatprep.subr.mxu0 0.0
        %1035 = vmatpush1.msra.mxu0 0.0
        %1036 = vmatprep.subr.mxu0 0.0
        %1037 = vmatpush1.msra.mxu0 0.0
        %1038 = vmatprep.subr.mxu0 0.0
        %1039 = vmatpush1.msra.mxu0 0.0
        %1040 = vmatprep.subr.mxu0 0.0
        %1041 = vmatpush1.msra.mxu0 0.0
        %1042 = vmatprep.subr.mxu0 0.0
        %1043 = vmatpush1.msra.mxu0 0.0
        %1044 = vmatprep.subr.mxu0 0.0
        %1045 = vmatpush1.msra.mxu0 0.0
        %1046 = vmatprep.subr.mxu0 0.0
        %1047 = vmatpush1.msra.mxu0 0.0
        %1048 = vmatprep.subr.mxu0 0.0
        %1049 = vmatpush1.msra.mxu0 0.0
        %1050 = vmatprep.subr.mxu0 0.0
        %1051 = vmatpush1.msra.mxu0 0.0
        %1052 = vmatprep.subr.mxu0 0.0
        %1053 = vmatpush1.msra.mxu0 0.0
        %1054 = vmatprep.subr.mxu0 0.0
        %1055 = vmatpush1.msra.mxu0 0.0
        %1056 = vmatprep.subr.mxu0 0.0
        %1057 = vmatpush1.msra.mxu0 0.0
        %1058 = vmatprep.subr.mxu0 0.0
        %1059 = vmatpush1.msra.mxu0 0.0
        %1060 = vmatprep.subr.mxu0 0.0
        %1061 = vmatpush1.msra.mxu0 0.0
        %1062 = vmatprep.mubr.f32.mxu0 0.0
        %1063 = vmatmul.mubr.f32.gmra.mrb[0].mxu0 %v993
        %v1064 = vpop.f32.mrb[0].mxu0
        %v1065 = vadd.f32 %v984, %v1064
        %v1066 = vpop.f32.mrb[0].mxu0
        %1067 = vmatprep.mubr.f32.mxu0 0.0
        %1068 = vmatmul.mubr.f32.gmra.mrb[0].mxu0 %v996
        %v1069 = vpop.f32.mrb[0].mxu0
        %v1070 = vadd.f32 %v989, %v1069
        %v1071 = vpop.f32.mrb[0].mxu0
        %1072 = vdwg.mxu0
        %v1073 = vld [vmem:[#allocation11] sm:$0x1]
        %v1075 = vlaneseq
        %v1076 = vshrl.u32 %v1075, 7
        %v1077 = vsub.s32 0, %v1076
        %v1078 = vrot.slane %v1073, %v1077
        %v1080 = vadd.f32 %v1065, %v1078
        %v1081 = vadd.f32 %v1070, %v1078
        %1082 = vst.msk [vmem:[%s406] sm:$0xff] %vm415, %v1080
        %1083 = vst.msk [vmem:[%s406 + $0x8] sm:$0xff] %vm415, %v1081
        %s1084 = sand.u32 %s193, 1
        %s1085 = scalar_lea.sflag [#allocation4], %s1084
        %s1086 = sand.u32 %s193, 1
        %s1087 = smul.addr %s1086, 16
        %s1088 = scalar_lea.vmem [#allocation13], %s1087
        // Predicated region
        $region69: #{tpu_custom_call.1} parent=43 // pred_check
          %p1089 = pneg %p203
        $region70: #{tpu_custom_call.1} parent=43 // pred_check_branch
          %1091 = sbr.rel (%p1089) target = $region72
        $region71: #{tpu_custom_call.1} parent=43 // pred_region
          %s1092 = smul.u32 2, %s33
          %s1094 = ssub.s32 256, 256
          %1095 = vsyncadd %s1085, %s1094
          %s1096 = smul.addr %s32, 2
          %s1097 = sadd.s32 %s1092, %s1096
          %s1098 = smul.addr %s1097, 128
          %s1099 = scalar_lea.hbm %s6, %s1098
          %s1100 = sshll.u32 %s1088, 4
          %s1101 = int_to_ptr.vmem [resolvable:$true] %s1100
          %1106 = dma.vmem_to_hbm [thread:$0]  %s1101, 256, %s1099, %s1085, 128, 128, 8
        $region72: #{tpu_custom_call.1} parent=43 // pred_fallthru
          _
      $region44: #{tpu_custom_call.1} parent=5 // pred_fallthru
        _
      %p1107 = scmp.le.s32.totalorder 2, %s23
      // Predicated region
      $region73: #{tpu_custom_call.1} parent=5 // pred_check
        %p1108 = pneg %p1107
      $region74: #{tpu_custom_call.1} parent=5 // pred_check_branch
        %1110 = sbr.rel (%p1108) target = $region76
      $region75: #{tpu_custom_call.1} parent=5 // pred_region
        %s1111 = ssub.s32 %s23, 2
        // Predicated region
        $region77: #{tpu_custom_call.1} parent=75 // pred_check
          %p1112 = pneg %p209
        $region78: #{tpu_custom_call.1} parent=75 // pred_check_branch
          %1114 = sbr.rel (%p1112) target = $region80
        $region79: #{tpu_custom_call.1} parent=75 // pred_region
          %s1115 = sand.u32 %s194, 1
          %s1116 = scalar_lea.sflag [#allocation4], %s1115
          %s1117 = sand.u32 %s194, 1
          %s1118 = smul.addr %s1117, 16
          %s1119 = scalar_lea.vmem [#allocation13], %s1118
          %1120 = dma.done %s1116, 256
        $region80: #{tpu_custom_call.1} parent=75 // pred_fallthru
          _
      $region76: #{tpu_custom_call.1} parent=5 // pred_fallthru
        _
    $region6: #{tpu_custom_call.1} parent=1 // loop_footer
      %s27 = sadd.s32 1, %s23
    $region7: #{tpu_custom_call.1} parent=1 // loop_footer_branch
      %22 = sbr.rel target = $region3
    $region8: #{tpu_custom_call.1} parent=1 // loop_exit
      _
    %1121 = vsyncpa [#allocation3], 1
    %s1122 = scalar_lea.sflag [#allocation3], 1
    %1123 = vsyncpa %s1122, 1
    %1124 = vsyncpa [#allocation6], 1
    %s1125 = scalar_lea.sflag [#allocation6], 1
    %1126 = vsyncpa %s1125, 1
    %1127 = vsyncpa [#allocation9], 1
    %1128 = vsyncpa [#allocation12], 1
    %1129 = vsyncpa [#allocation4], 1
    %s1130 = scalar_lea.sflag [#allocation4], 1
    %1131 = vsyncpa %s1130, 1

// kernel: tpu_custom_call.1
$region0: #{tpu_custom_call.1}
  #allocation0 [shape = 'u32[]', space=smem, size = 0x4, offset = 0x4, fixed_abs, tag = 'smem constant byte address 0x4 - core index']
  #allocation1 [shape = 'u32[144,128]{1,0:T(1,128)}', space=vmem, size = 0x12000, scoped, tag = 'internal scratch']
  %s0 = inlined_call_operand.hbm [shape: f32[2,16,32], index: 0, kind: input, shape index: {}]
  %s1 = inlined_call_operand.hbm [shape: f32[2,2,16,128], index: 1, kind: input, shape index: {}]
  %s2 = inlined_call_operand.hbm [shape: f32[2,2,128,16], index: 2, kind: input, shape index: {}]
  %s3 = inlined_call_operand.hbm [shape: f32[32,32], index: 3, kind: input, shape index: {}]
  %s4 = inlined_call_operand.hbm [shape: f32[2,16,32], index: 4, kind: input, shape index: {}]
  %s5 = inlined_call_operand.hbm [shape: f32[1,32], index: 5, kind: input, shape index: {}]
  %s6 = inlined_call_operand.hbm [shape: f32[2,16,32], index: 6, kind: output, shape index: {}]
  %s7 = sld [smem:[#allocation0]]
  $region81: #{tpu_custom_call.1} parent=0
    _
  %s9 = ssub.s32 1, %s7
  %s10 = scalar_select 0, %s9, %s7
  $region1: #{tpu_custom_call.1} parent=0
    #allocation2 [shape = 'u8[16384]{0}', space=vmem, size = 0x4000, scoped, tag = 'input window, operand 0']
    #allocation3 [shape = 's32[2]{0}', space=sflag, size = 0x8, scoped, tag = 'scoped memory for tpu_custom_call.1']
    #allocation4 [shape = 's32[2]{0}', space=sflag, size = 0x8, scoped, tag = 'scoped memory for tpu_custom_call.1']
    #allocation5 [shape = 'u8[32768]{0}', space=vmem, size = 0x8000, scoped, tag = 'input window, operand 1']
    #allocation6 [shape = 's32[2]{0}', space=sflag, size = 0x8, scoped, tag = 'scoped memory for tpu_custom_call.1']
    #allocation7 [shape = 'u8[262144]{0}', space=vmem, size = 0x40000, scoped, tag = 'input window, operand 2']
    #allocation8 [shape = 'u8[16384]{0}', space=vmem, size = 0x4000, scoped, tag = 'input window, operand 3, single buffered']
    #allocation9 [shape = 's32[1]{0}', space=sflag, size = 0x4, scoped, tag = 'scoped memory for tpu_custom_call.1']
    #allocation10 [shape = 'u8[16384]{0}', space=vmem, size = 0x4000, scoped, tag = 'input window, operand 4, single buffered']
    #allocation11 [shape = 'u8[512]{0}', space=vmem, size = 0x400, scoped, tag = 'input window, operand 5, single buffered']
    #allocation12 [shape = 's32[1]{0}', space=sflag, size = 0x4, scoped, tag = 'scoped memory for tpu_custom_call.1']
    #allocation13 [shape = 'u8[16384]{0}', space=vmem, size = 0x4000, scoped, tag = 'output window, operand 0']
    %11 = vsyncpa [#allocation3], 0
    %s12 = scalar_lea.sflag [#allocation3], 1
    %13 = vsyncpa %s12, 0
    %14 = vsyncpa [#allocation6], 0
    %s15 = scalar_lea.sflag [#allocation6], 1
    %16 = vsyncpa %s15, 0
    %17 = vsyncpa [#allocation9], 0
    %18 = vsyncpa [#allocation12], 0
    %19 = vsyncpa [#allocation4], 0
    %s20 = scalar_lea.sflag [#allocation4], 1
    %21 = vsyncpa %s20, 0
    loop: start=0, step=1, limit=4
    $region2: #{tpu_custom_call.1} parent=1 // loop_pre_header
      _
    $region3: #{tpu_custom_call.1} parent=1 // loop_header
      %s23 = sphi 0, %s27
      %p24 = scmp.ge.s32.totalorder %s23, 4
      %s30 = sphi 0, %s42
      %s31 = sphi 0, %s38
      %s32 = sphi 0, %s30
      %s33 = sphi 0, %s31
      %s34 = sphi 0, %s32
      %s35 = sphi 0, %s33
      %s47 = sphi 0, %s49
      %s50 = sphi 0, %s47
      %s51 = sphi 0, %s50
      %s67 = sphi 0, %s51
      %s73 = sphi 0, %s75
      %s76 = sphi 0, %s73
      %s77 = sphi 0, %s76
      %s93 = sphi 0, %s77
      %s99 = sphi 0, %s101
      %s102 = sphi 0, %s99
      %s103 = sphi 0, %s102
      %s119 = sphi 0, %s103
      %s123 = sphi 0, %s123
      %s125 = sphi 0, %s123
      %s126 = sphi 0, %s125
      %s140 = sphi 0, %s126
      %s144 = sphi 0, %s144
      %s146 = sphi 0, %s144
      %s147 = sphi 0, %s146
      %s161 = sphi 0, %s147
      %s165 = sphi 0, %s165
      %s167 = sphi 0, %s165
      %s168 = sphi 0, %s167
      %s182 = sphi 0, %s168
      %s190 = sphi 0, %s192
      %s193 = sphi 0, %s190
      %s194 = sphi 0, %s193
      %s210 = sphi 0, %s194
    $region4: #{tpu_custom_call.1} parent=1 // loop_header_branch
      %26 = sbr.rel (%p24) target = $region8
    $region5: #{tpu_custom_call.1} parent=1 // loop_body
      %s28 = ssub.s32 %s23, 1
      %s29 = ssub.s32 %s23, 2
      %s36 = sadd.s32 1, %s31
      %p37 = scmp.ge.s32.totalorder %s36, 1
      %s38 = scalar_select %p37, 0, %s36
      %s39 = sadd.s32 1, %s30
      %s40 = scalar_select %p37, %s39, %s30
      %p41 = scmp.ge.s32.totalorder %s40, 2
      %s42 = scalar_select %p41, 0, %s40
      %s43 = ssub.s32 %s30, %s42
      %s44 = ssub.s32 %s31, %s38
      %s45 = sor.u32 %s43, %s44
      %p46 = scmp.eq.s32.totalorder %s45, 0
      %s48 = sadd.s32 %s47, 1
      %s49 = scalar_select %p46, %s47, %s48
      %p52 = pneg %p46
      %p53 = scmp.eq.s32.totalorder %s23, 1
      %p54 = por %p52, %p53
      %p55 = scmp.ne.s32.totalorder %s47, %s50
      %p56 = scmp.eq.s32.totalorder %s23, 0
      %p57 = por %p55, %p56
      %p58 = scmp.ne.s32.totalorder %s47, %s50
      %p59 = scmp.eq.s32.totalorder %s28, 1
      %p60 = por %p58, %p59
      %p61 = scmp.ne.s32.totalorder %s50, %s51
      %p62 = scmp.eq.s32.totalorder %s28, 0
      %p63 = por %p61, %p62
      %p64 = scmp.ne.s32.totalorder %s50, %s51
      %p65 = scmp.eq.s32.totalorder %s29, 1
      %p66 = por %p64, %p65
      %p68 = scmp.ne.s32.totalorder %s51, %s67
      %p69 = scmp.eq.s32.totalorder %s29, 0
      %p70 = por %p68, %p69
      %s71 = ssub.s32 %s30, %s42
      %p72 = scmp.eq.s32.totalorder %s71, 0
      %s74 = sadd.s32 %s73, 1
      %s75 = scalar_select %p72, %s73, %s74
      %p78 = pneg %p72
      %p79 = scmp.eq.s32.totalorder %s23, 1
      %p80 = por %p78, %p79
      %p81 = scmp.ne.s32.totalorder %s73, %s76
      %p82 = scmp.eq.s32.totalorder %s23, 0
      %p83 = por %p81, %p82
      %p84 = scmp.ne.s32.totalorder %s73, %s76
      %p85 = scmp.eq.s32.totalorder %s28, 1
      %p86 = por %p84, %p85
      %p87 = scmp.ne.s32.totalorder %s76, %s77
      %p88 = scmp.eq.s32.totalorder %s28, 0
      %p89 = por %p87, %p88
      %p90 = scmp.ne.s32.totalorder %s76, %s77
      %p91 = scmp.eq.s32.totalorder %s29, 1
      %p92 = por %p90, %p91
      %p94 = scmp.ne.s32.totalorder %s77, %s93
      %p95 = scmp.eq.s32.totalorder %s29, 0
      %p96 = por %p94, %p95
      %s97 = ssub.s32 %s30, %s42
      %p98 = scmp.eq.s32.totalorder %s97, 0
      %s100 = sadd.s32 %s99, 1
      %s101 = scalar_select %p98, %s99, %s100
      %p104 = pneg %p98
      %p105 = scmp.eq.s32.totalorder %s23, 1
      %p106 = por %p104, %p105
      %p107 = scmp.ne.s32.totalorder %s99, %s102
      %p108 = scmp.eq.s32.totalorder %s23, 0
      %p109 = por %p107, %p108
      %p110 = scmp.ne.s32.totalorder %s99, %s102
      %p111 = scmp.eq.s32.totalorder %s28, 1
      %p112 = por %p110, %p111
      %p113 = scmp.ne.s32.totalorder %s102, %s103
      %p114 = scmp.eq.s32.totalorder %s28, 0
      %p115 = por %p113, %p114
      %p116 = scmp.ne.s32.totalorder %s102, %s103
      %p117 = scmp.eq.s32.totalorder %s29, 1
      %p118 = por %p116, %p117
      %p120 = scmp.ne.s32.totalorder %s103, %s119
      %p121 = scmp.eq.s32.totalorder %s29, 0
      %p122 = por %p120, %p121
      %s124 = sadd.s32 %s123, 1
      %p127 = scmp.eq.s32.totalorder %s23, 1
      %p128 = scmp.ne.s32.totalorder %s123, %s125
      %p129 = scmp.eq.s32.totalorder %s23, 0
      %p130 = por %p128, %p129
      %p131 = scmp.ne.s32.totalorder %s123, %s125
      %p132 = scmp.eq.s32.totalorder %s28, 1
      %p133 = por %p131, %p132
      %p134 = scmp.ne.s32.totalorder %s125, %s126
      %p135 = scmp.eq.s32.totalorder %s28, 0
      %p136 = por %p134, %p135
      %p137 = scmp.ne.s32.totalorder %s125, %s126
      %p138 = scmp.eq.s32.totalorder %s29, 1
      %p139 = por %p137, %p138
      %p141 = scmp.ne.s32.totalorder %s126, %s140
      %p142 = scmp.eq.s32.totalorder %s29, 0
      %p143 = por %p141, %p142
      %s145 = sadd.s32 %s144, 1
      %p148 = scmp.eq.s32.totalorder %s23, 1
      %p149 = scmp.ne.s32.totalorder %s144, %s146
      %p150 = scmp.eq.s32.totalorder %s23, 0
      %p151 = por %p149, %p150
      %p152 = scmp.ne.s32.totalorder %s144, %s146
      %p153 = scmp.eq.s32.totalorder %s28, 1
      %p154 = por %p152, %p153
      %p155 = scmp.ne.s32.totalorder %s146, %s147
      %p156 = scmp.eq.s32.totalorder %s28, 0
      %p157 = por %p155, %p156
      %p158 = scmp.ne.s32.totalorder %s146, %s147
      %p159 = scmp.eq.s32.totalorder %s29, 1
      %p160 = por %p158, %p159
      %p162 = scmp.ne.s32.totalorder %s147, %s161
      %p163 = scmp.eq.s32.totalorder %s29, 0
      %p164 = por %p162, %p163
      %s166 = sadd.s32 %s165, 1
      %p169 = scmp.eq.s32.totalorder %s23, 1
      %p170 = scmp.ne.s32.totalorder %s165, %s167
      %p171 = scmp.eq.s32.totalorder %s23, 0
      %p172 = por %p170, %p171
      %p173 = scmp.ne.s32.totalorder %s165, %s167
      %p174 = scmp.eq.s32.totalorder %s28, 1
      %p175 = por %p173, %p174
      %p176 = scmp.ne.s32.totalorder %s167, %s168
      %p177 = scmp.eq.s32.totalorder %s28, 0
      %p178 = por %p176, %p177
      %p179 = scmp.ne.s32.totalorder %s167, %s168
      %p180 = scmp.eq.s32.totalorder %s29, 1
      %p181 = por %p179, %p180
      %p183 = scmp.ne.s32.totalorder %s168, %s182
      %p184 = scmp.eq.s32.totalorder %s29, 0
      %p185 = por %p183, %p184
      %s186 = ssub.s32 %s30, %s42
      %s187 = ssub.s32 %s31, %s38
      %s188 = sor.u32 %s186, %s187
      %p189 = scmp.eq.s32.totalorder %s188, 0
      %s191 = sadd.s32 %s190, 1
      %s192 = scalar_select %p189, %s190, %s191
      %p195 = pneg %p189
      %p196 = scmp.eq.s32.totalorder %s23, 1
      %p197 = por %p195, %p196
      %p198 = scmp.ne.s32.totalorder %s190, %s193
      %p199 = scmp.eq.s32.totalorder %s23, 0
      %p200 = por %p198, %p199
      %p201 = scmp.ne.s32.totalorder %s190, %s193
      %p202 = scmp.eq.s32.totalorder %s28, 1
      %p203 = por %p201, %p202
      %p204 = scmp.ne.s32.totalorder %s193, %s194
      %p205 = scmp.eq.s32.totalorder %s28, 0
      %p206 = por %p204, %p205
      %p207 = scmp.ne.s32.totalorder %s193, %s194
      %p208 = scmp.eq.s32.totalorder %s29, 1
      %p209 = por %p207, %p208
      %p211 = scmp.ne.s32.totalorder %s194, %s210
      %p212 = scmp.eq.s32.totalorder %s29, 0
      %p213 = por %p211, %p212
      %p214 = scmp.le.s32.totalorder 1, %s23
      %p215 = scmp.lt.s32.totalorder %s23, 3
      %p216 = pnand %p214, %p215
      %p217 = pneg %p216
      // Predicated region
      $region9: #{tpu_custom_call.1} parent=5 // pred_check
        _
      $region10: #{tpu_custom_call.1} parent=5 // pred_check_branch
        %219 = sbr.rel (%p216) target = $region12
      $region11: #{tpu_custom_call.1} parent=5 // pred_region
        %s220 = ssub.s32 %s23, 1
        // Predicated region
        $region13: #{tpu_custom_call.1} parent=11 // pred_check
          %p221 = pneg %p136
        $region14: #{tpu_custom_call.1} parent=11 // pred_check_branch
          %223 = sbr.rel (%p221) target = $region16
        $region15: #{tpu_custom_call.1} parent=11 // pred_region
          %s225 = ssub.s32 512, 512
          %226 = vsyncadd [#allocation9], %s225
          %s227 = sshll.u32 [#allocation8], 4
          %s228 = int_to_ptr.vmem [resolvable:$true] %s227
          %233 = dma.hbm_to_vmem [thread:$0]  %s3, 512, %s228, [#allocation9], 128, 128, 8
        $region16: #{tpu_custom_call.1} parent=11 // pred_fallthru
          _
        // Predicated region
        $region17: #{tpu_custom_call.1} parent=11 // pred_check
          %p234 = pneg %p157
        $region18: #{tpu_custom_call.1} parent=11 // pred_check_branch
          %236 = sbr.rel (%p234) target = $region20
        $region19: #{tpu_custom_call.1} parent=11 // pred_region
          %s238 = ssub.s32 512, 512
          %239 = vsyncadd [#allocation9], %s238
          %s240 = sshll.u32 [#allocation10], 4
          %s241 = int_to_ptr.vmem [resolvable:$true] %s240
          %246 = dma.hbm_to_vmem [thread:$0]  %s4, 512, %s241, [#allocation9], 128, 128, 8
        $region20: #{tpu_custom_call.1} parent=11 // pred_fallthru
          _
        // Predicated region
        $region21: #{tpu_custom_call.1} parent=11 // pred_check
          %p247 = pneg %p178
        $region22: #{tpu_custom_call.1} parent=11 // pred_check_branch
          %249 = sbr.rel (%p247) target = $region24
        $region23: #{tpu_custom_call.1} parent=11 // pred_region
          %s251 = ssub.s32 16, 16
          %252 = vsyncadd [#allocation12], %s251
          %s254 = sshll.u32 [#allocation11], 4
          %s255 = int_to_ptr.vmem [resolvable:$true] %s254
          %257 = dma.hbm_to_vmem [thread:$0]  %s5, 16, %s255, [#allocation12]
        $region24: #{tpu_custom_call.1} parent=11 // pred_fallthru
          _
      $region12: #{tpu_custom_call.1} parent=5 // pred_fallthru
        _
      %p258 = scmp.lt.s32.totalorder %s23, 2
      // Predicated region
      $region25: #{tpu_custom_call.1} parent=5 // pred_check
        %p259 = pneg %p258
      $region26: #{tpu_custom_call.1} parent=5 // pred_check_branch
        %261 = sbr.rel (%p259) target = $region28
      $region27: #{tpu_custom_call.1} parent=5 // pred_region
        // Predicated region
        $region29: #{tpu_custom_call.1} parent=27 // pred_check
          %p262 = pneg %p57
        $region30: #{tpu_custom_call.1} parent=27 // pred_check_branch
          %264 = sbr.rel (%p262) target = $region32
        $region31: #{tpu_custom_call.1} parent=27 // pred_region
          %s265 = sand.u32 %s47, 1
          %s266 = scalar_lea.sflag [#allocation3], %s265
          %s267 = sand.u32 %s47, 1
          %s268 = smul.addr %s267, 16
          %s269 = scalar_lea.vmem [#allocation2], %s268
          %s270 = smul.u32 2, %s31
          %s272 = ssub.s32 256, 256
          %273 = vsyncadd %s266, %s272
          %s274 = smul.addr %s30, 2
          %s275 = sadd.s32 %s270, %s274
          %s276 = smul.addr %s275, 128
          %s277 = scalar_lea.hbm %s0, %s276
          %s278 = sshll.u32 %s269, 4
          %s279 = int_to_ptr.vmem [resolvable:$true] %s278
          %284 = dma.hbm_to_vmem [thread:$0]  %s277, 256, %s279, %s266, 128, 128, 8
        $region32: #{tpu_custom_call.1} parent=27 // pred_fallthru
          _
        // Predicated region
        $region33: #{tpu_custom_call.1} parent=27 // pred_check
          %p285 = pneg %p83
        $region34: #{tpu_custom_call.1} parent=27 // pred_check_branch
          %287 = sbr.rel (%p285) target = $region36
        $region35: #{tpu_custom_call.1} parent=27 // pred_region
          %s288 = sand.u32 %s23, 1
          %s289 = scalar_lea.sflag [#allocation6], %s288
          %s290 = sand.u32 %s73, 1
          %s291 = smul.addr %s290, 32
          %s292 = scalar_lea.vmem [#allocation5], %s291
          %s294 = ssub.s32 512, 512
          %295 = vsyncadd %s289, %s294
          %s296 = smul.addr %s30, 4
          %s297 = smul.addr %s296, 128
          %s298 = scalar_lea.hbm %s1, %s297
          %s299 = sshll.u32 %s292, 4
          %s300 = int_to_ptr.vmem [resolvable:$true] %s299
          %305 = dma.hbm_to_vmem [thread:$0]  %s298, 512, %s300, %s289, 128, 128, 8
        $region36: #{tpu_custom_call.1} parent=27 // pred_fallthru
          _
        // Predicated region
        $region37: #{tpu_custom_call.1} parent=27 // pred_check
          %p306 = pneg %p109
        $region38: #{tpu_custom_call.1} parent=27 // pred_check_branch
          %308 = sbr.rel (%p306) target = $region40
        $region39: #{tpu_custom_call.1} parent=27 // pred_region
          %s309 = sand.u32 %s23, 1
          %s310 = scalar_lea.sflag [#allocation6], %s309
          %s311 = sand.u32 %s99, 1
          %s312 = smul.addr %s311, 256
          %s313 = scalar_lea.vmem [#allocation7], %s312
          %s315 = ssub.s32 4096, 4096
          %316 = vsyncadd %s310, %s315
          %s317 = smul.addr %s30, 32
          %s318 = smul.addr %s317, 128
          %s319 = scalar_lea.hbm %s2, %s318
          %s320 = sshll.u32 %s313, 4
          %s321 = int_to_ptr.vmem [resolvable:$true] %s320
          %326 = dma.hbm_to_vmem [thread:$0]  %s319, 4096, %s321, %s310, 128, 128, 8
        $region40: #{tpu_custom_call.1} parent=27 // pred_fallthru
          _
      $region28: #{tpu_custom_call.1} parent=5 // pred_fallthru
        _
      %p327 = scmp.le.s32.totalorder 1, %s23
      %p328 = scmp.lt.s32.totalorder %s23, 3
      %p329 = pnand %p327, %p328
      %p330 = pneg %p329
      // Predicated region
      $region41: #{tpu_custom_call.1} parent=5 // pred_check
        _
      $region42: #{tpu_custom_call.1} parent=5 // pred_check_branch
        %332 = sbr.rel (%p329) target = $region44
      $region43: #{tpu_custom_call.1} parent=5 // pred_region
        %s333 = ssub.s32 %s23, 1
        %s334 = sand.u32 %s50, 1
        %s335 = scalar_lea.sflag [#allocation3], %s334
        %s336 = sand.u32 %s50, 1
        %s337 = smul.addr %s336, 16
        %s338 = scalar_lea.vmem [#allocation2], %s337
        // Predicated region
        $region45: #{tpu_custom_call.1} parent=43 // pred_check
          %p339 = pneg %p63
        $region46: #{tpu_custom_call.1} parent=43 // pred_check_branch
          %341 = sbr.rel (%p339) target = $region48
        $region47: #{tpu_custom_call.1} parent=43 // pred_region
          %342 = dma.done %s335, 256
        $region48: #{tpu_custom_call.1} parent=43 // pred_fallthru
          _
        %s343 = sand.u32 %s28, 1
        %s344 = scalar_lea.sflag [#allocation6], %s343
        %s345 = sand.u32 %s76, 1
        %s346 = smul.addr %s345, 32
        %s347 = scalar_lea.vmem [#allocation5], %s346
        // Predicated region
        $region49: #{tpu_custom_call.1} parent=43 // pred_check
          %p348 = pneg %p89
        $region50: #{tpu_custom_call.1} parent=43 // pred_check_branch
          %350 = sbr.rel (%p348) target = $region52
        $region51: #{tpu_custom_call.1} parent=43 // pred_region
          %351 = dma.done %s344, 512
        $region52: #{tpu_custom_call.1} parent=43 // pred_fallthru
          _
        %s352 = sand.u32 %s28, 1
        %s353 = scalar_lea.sflag [#allocation6], %s352
        %s354 = sand.u32 %s102, 1
        %s355 = smul.addr %s354, 256
        %s356 = scalar_lea.vmem [#allocation7], %s355
        // Predicated region
        $region53: #{tpu_custom_call.1} parent=43 // pred_check
          %p357 = pneg %p115
        $region54: #{tpu_custom_call.1} parent=43 // pred_check_branch
          %359 = sbr.rel (%p357) target = $region56
        $region55: #{tpu_custom_call.1} parent=43 // pred_region
          %360 = dma.done %s353, 4096
        $region56: #{tpu_custom_call.1} parent=43 // pred_fallthru
          _
        // Predicated region
        $region57: #{tpu_custom_call.1} parent=43 // pred_check
          %p361 = pneg %p136
        $region58: #{tpu_custom_call.1} parent=43 // pred_check_branch
          %363 = sbr.rel (%p361) target = $region60
        $region59: #{tpu_custom_call.1} parent=43 // pred_region
          %364 = dma.done [#allocation9], 512
        $region60: #{tpu_custom_call.1} parent=43 // pred_fallthru
          _
        // Predicated region
        $region61: #{tpu_custom_call.1} parent=43 // pred_check
          %p365 = pneg %p157
        $region62: #{tpu_custom_call.1} parent=43 // pred_check_branch
          %367 = sbr.rel (%p365) target = $region64
        $region63: #{tpu_custom_call.1} parent=43 // pred_region
          %368 = dma.done [#allocation9], 512
        $region64: #{tpu_custom_call.1} parent=43 // pred_fallthru
          _
        // Predicated region
        $region65: #{tpu_custom_call.1} parent=43 // pred_check
          %p369 = pneg %p178
        $region66: #{tpu_custom_call.1} parent=43 // pred_check_branch
          %371 = sbr.rel (%p369) target = $region68
        $region67: #{tpu_custom_call.1} parent=43 // pred_region
          %372 = dma.done [#allocation12], 16
        $region68: #{tpu_custom_call.1} parent=43 // pred_fallthru
          _
        %s373 = sand.u32 %s50, 1
        %s374 = scalar_lea.sflag [#allocation3], %s373
        %s375 = sand.u32 %s50, 1
        %s376 = smul.addr %s375, 16
        %s377 = scalar_lea.vmem [#allocation2], %s376
        %p378 = pneg %p63
        %p379 = pneg %p60
        %s380 = sand.u32 %s28, 1
        %s381 = scalar_lea.sflag [#allocation6], %s380
        %s382 = sand.u32 %s76, 1
        %s383 = smul.addr %s382, 32
        %s384 = scalar_lea.vmem [#allocation5], %s383
        %p385 = pneg %p89
        %p386 = pneg %p86
        %s387 = sand.u32 %s28, 1
        %s388 = scalar_lea.sflag [#allocation6], %s387
        %s389 = sand.u32 %s102, 1
        %s390 = smul.addr %s389, 256
        %s391 = scalar_lea.vmem [#allocation7], %s390
        %p392 = pneg %p115
        %p393 = pneg %p112
        %p394 = pneg %p136
        %p395 = pneg %p133
        %p396 = pneg %p157
        %p397 = pneg %p154
        %p398 = pneg %p178
        %p399 = pneg %p175
        %p400 = pneg %p206
        %p401 = pneg %p203
        %s402 = sand.u32 %s193, 1
        %s403 = scalar_lea.sflag [#allocation4], %s402
        %s404 = sand.u32 %s193, 1
        %s405 = smul.addr %s404, 16
        %s406 = scalar_lea.vmem [#allocation13], %s405
        %s407 = smul.u32 2, %s33
        %s408 = smul.u32 2, %s33
        %v409 = vld [vmem:[%s338] sm:$0xff]
        %v410 = vld [vmem:[%s338 + $0x8] sm:$0xff]
        %v411 = vld [vmem:[#allocation8] sm:$0xff]
        %v412 = vld [vmem:[#allocation8 + $0x8] sm:$0xff]
        %v413 = vld [vmem:[#allocation8 + $0x10] sm:$0xff]
        %v414 = vld [vmem:[#allocation8 + $0x18] sm:$0xff]
        %vm415 = vcmask 261120
        %v417 = vsel %vm415, %v409, 0
        %v420 = vsel %vm415, %v410, 0
        %422 = vmatprep.subr.mxu0 0.0
        %423 = vmatpush1.msra.mxu0 %v411
        %424 = vmatprep.subr.mxu0 0.0
        %425 = vmatpush1.msra.mxu0 %v412
        %426 = vmatprep.subr.mxu0 0.0
        %427 = vmatpush1.msra.mxu0 %v413
        %428 = vmatprep.subr.mxu0 0.0
        %429 = vmatpush1.msra.mxu0 %v414
        %430 = vmatprep.subr.mxu0 0.0
        %431 = vmatpush1.msra.mxu0 0.0
        %432 = vmatprep.subr.mxu0 0.0
        %433 = vmatpush1.msra.mxu0 0.0
        %434 = vmatprep.subr.mxu0 0.0
        %435 = vmatpush1.msra.mxu0 0.0
        %436 = vmatprep.subr.mxu0 0.0
        %437 = vmatpush1.msra.mxu0 0.0
        %438 = vmatprep.subr.mxu0 0.0
        %439 = vmatpush1.msra.mxu0 0.0
        %440 = vmatprep.subr.mxu0 0.0
        %441 = vmatpush1.msra.mxu0 0.0
        %442 = vmatprep.subr.mxu0 0.0
        %443 = vmatpush1.msra.mxu0 0.0
        %444 = vmatprep.subr.mxu0 0.0
        %445 = vmatpush1.msra.mxu0 0.0
        %446 = vmatprep.subr.mxu0 0.0
        %447 = vmatpush1.msra.mxu0 0.0
        %448 = vmatprep.subr.mxu0 0.0
        %449 = vmatpush1.msra.mxu0 0.0
        %450 = vmatprep.subr.mxu0 0.0
        %451 = vmatpush1.msra.mxu0 0.0
        %452 = vmatprep.subr.mxu0 0.0
        %453 = vmatpush1.msra.mxu0 0.0
        %454 = vmatprep.subr.mxu0 0.0
        %455 = vmatpush1.msra.mxu0 0.0
        %456 = vmatprep.subr.mxu0 0.0
        %457 = vmatpush1.msra.mxu0 0.0
        %458 = vmatprep.subr.mxu0 0.0
        %459 = vmatpush1.msra.mxu0 0.0
        %460 = vmatprep.subr.mxu0 0.0
        %461 = vmatpush1.msra.mxu0 0.0
        %462 = vmatprep.subr.mxu0 0.0
        %463 = vmatpush1.msra.mxu0 0.0
        %464 = vmatprep.subr.mxu0 0.0
        %465 = vmatpush1.msra.mxu0 0.0
        %466 = vmatprep.subr.mxu0 0.0
        %467 = vmatpush1.msra.mxu0 0.0
        %468 = vmatprep.subr.mxu0 0.0
        %469 = vmatpush1.msra.mxu0 0.0
        %470 = vmatprep.subr.mxu0 0.0
        %471 = vmatpush1.msra.mxu0 0.0
        %472 = vmatprep.subr.mxu0 0.0
        %473 = vmatpush1.msra.mxu0 0.0
        %474 = vmatprep.subr.mxu0 0.0
        %475 = vmatpush1.msra.mxu0 0.0
        %476 = vmatprep.subr.mxu0 0.0
        %477 = vmatpush1.msra.mxu0 0.0
        %478 = vmatprep.subr.mxu0 0.0
        %479 = vmatpush1.msra.mxu0 0.0
        %480 = vmatprep.subr.mxu0 0.0
        %481 = vmatpush1.msra.mxu0 0.0
        %482 = vmatprep.subr.mxu0 0.0
        %483 = vmatpush1.msra.mxu0 0.0
        %484 = vmatprep.subr.mxu0 0.0
        %485 = vmatpush1.msra.mxu0 0.0
        %486 = vmatprep.mubr.f32.mxu0 0.0
        %487 = vmatmul.mubr.f32.gmra.mrb[0].mxu0 %v417
        %v488 = vpop.f32.mrb[0].mxu0
        %v489 = vadd.f32 0.0, %v488
        %v490 = vpop.f32.mrb[0].mxu0
        %491 = vmatprep.mubr.f32.mxu0 0.0
        %492 = vmatmul.mubr.f32.gmra.mrb[0].mxu0 %v420
        %v493 = vpop.f32.mrb[0].mxu0
        %v494 = vadd.f32 0.0, %v493
        %v495 = vpop.f32.mrb[0].mxu0
        %496 = vdwg.mxu0
        %v497 = vld [vmem:[%s347] sm:$0xff]
        %v498 = vld [vmem:[%s347 + $0x8] sm:$0xff]
        %v499 = vld [vmem:[%s356] sm:$0xff]
        %v500 = vld [vmem:[%s356 + $0x8] sm:$0xff]
        %v501 = vld [vmem:[%s356 + $0x10] sm:$0xff]
        %v502 = vld [vmem:[%s356 + $0x18] sm:$0xff]
        %v503 = vld [vmem:[%s356 + $0x20] sm:$0xff]
        %v504 = vld [vmem:[%s356 + $0x28] sm:$0xff]
        %v505 = vld [vmem:[%s356 + $0x30] sm:$0xff]
        %v506 = vld [vmem:[%s356 + $0x38] sm:$0xff]
        %v507 = vld [vmem:[%s356 + $0x40] sm:$0xff]
        %v508 = vld [vmem:[%s356 + $0x48] sm:$0xff]
        %v509 = vld [vmem:[%s356 + $0x50] sm:$0xff]
        %v510 = vld [vmem:[%s356 + $0x58] sm:$0xff]
        %v511 = vld [vmem:[%s356 + $0x60] sm:$0xff]
        %v512 = vld [vmem:[%s356 + $0x68] sm:$0xff]
        %v513 = vld [vmem:[%s356 + $0x70] sm:$0xff]
        %v514 = vld [vmem:[%s356 + $0x78] sm:$0xff]
        %vm515 = vcmask 130048
        %v517 = vsel %vm515, %v489, 0
        %v520 = vsel %vm515, %v494, 0
        %522 = vmatprep.subr.mxu0 0.0
        %523 = vmatpush1.msra.mxu0 %v497
        %524 = vmatprep.subr.mxu0 0.0
        %525 = vmatpush1.msra.mxu0 %v498
        %526 = vmatprep.subr.mxu0 0.0
        %527 = vmatpush1.msra.mxu0 0.0
        %528 = vmatprep.subr.mxu0 0.0
        %529 = vmatpush1.msra.mxu0 0.0
        %530 = vmatprep.subr.mxu0 0.0
        %531 = vmatpush1.msra.mxu0 0.0
        %532 = vmatprep.subr.mxu0 0.0
        %533 = vmatpush1.msra.mxu0 0.0
        %534 = vmatprep.subr.mxu0 0.0
        %535 = vmatpush1.msra.mxu0 0.0
        %536 = vmatprep.subr.mxu0 0.0
        %537 = vmatpush1.msra.mxu0 0.0
        %538 = vmatprep.subr.mxu0 0.0
        %539 = vmatpush1.msra.mxu0 0.0
        %540 = vmatprep.subr.mxu0 0.0
        %541 = vmatpush1.msra.mxu0 0.0
        %542 = vmatprep.subr.mxu0 0.0
        %543 = vmatpush1.msra.mxu0 0.0
        %544 = vmatprep.subr.mxu0 0.0
        %545 = vmatpush1.msra.mxu0 0.0
        %546 = vmatprep.subr.mxu0 0.0
        %547 = vmatpush1.msra.mxu0 0.0
        %548 = vmatprep.subr.mxu0 0.0
        %549 = vmatpush1.msra.mxu0 0.0
        %550 = vmatprep.subr.mxu0 0.0
        %551 = vmatpush1.msra.mxu0 0.0
        %552 = vmatprep.subr.mxu0 0.0
        %553 = vmatpush1.msra.mxu0 0.0
        %554 = vmatprep.subr.mxu0 0.0
        %555 = vmatpush1.msra.mxu0 0.0
        %556 = vmatprep.subr.mxu0 0.0
        %557 = vmatpush1.msra.mxu0 0.0
        %558 = vmatprep.subr.mxu0 0.0
        %559 = vmatpush1.msra.mxu0 0.0
        %560 = vmatprep.subr.mxu0 0.0
        %561 = vmatpush1.msra.mxu0 0.0
        %562 = vmatprep.subr.mxu0 0.0
        %563 = vmatpush1.msra.mxu0 0.0
        %564 = vmatprep.subr.mxu0 0.0
        %565 = vmatpush1.msra.mxu0 0.0
        %566 = vmatprep.subr.mxu0 0.0
        %567 = vmatpush1.msra.mxu0 0.0
        %568 = vmatprep.subr.mxu0 0.0
        %569 = vmatpush1.msra.mxu0 0.0
        %570 = vmatprep.subr.mxu0 0.0
        %571 = vmatpush1.msra.mxu0 0.0
        %572 = vmatprep.subr.mxu0 0.0
        %573 = vmatpush1.msra.mxu0 0.0
        %574 = vmatprep.subr.mxu0 0.0
        %575 = vmatpush1.msra.mxu0 0.0
        %576 = vmatprep.subr.mxu0 0.0
        %577 = vmatpush1.msra.mxu0 0.0
        %578 = vmatprep.subr.mxu0 0.0
        %579 = vmatpush1.msra.mxu0 0.0
        %580 = vmatprep.subr.mxu0 0.0
        %581 = vmatpush1.msra.mxu0 0.0
        %582 = vmatprep.subr.mxu0 0.0
        %583 = vmatpush1.msra.mxu0 0.0
        %584 = vmatprep.subr.mxu0 0.0
        %585 = vmatpush1.msra.mxu0 0.0
        %586 = vmatprep.mubr.f32.mxu0 0.0
        %587 = vmatmul.mubr.f32.gmra.mrb[0].mxu0 %v517
        %v588 = vpop.f32.mrb[0].mxu0
        %v589 = vadd.f32 0.0, %v588
        %v590 = vpop.f32.mrb[0].mxu0
        %591 = vmatprep.mubr.f32.mxu0 0.0
        %592 = vmatmul.mubr.f32.gmra.mrb[0].mxu0 %v520
        %v593 = vpop.f32.mrb[0].mxu0
        %v594 = vadd.f32 0.0, %v593
        %v595 = vpop.f32.mrb[0].mxu0
        %596 = vdwg.mxu0
        %597 = vmax.xlane.f32.xlu0 %v589
        %v598 = vpop.xlane.xlu0 %597
        %599 = vmax.xlane.f32.xlu0 %v594
        %v600 = vpop.xlane.xlu0 %599
        %v601 = vsub.f32 %v589, %v598
        %v602 = vsub.f32 %v594, %v600
        %v603 = vmul.f32 %v601, 1.442695
        %v604 = vpow.pop %v603
        %v605 = vmul.f32 %v602, 1.442695
        %v606 = vpow.pop %v605
        %607 = vadd.xlane.f32.xlu0 %v604
        %v608 = vpop.xlane.xlu0 %607
        %609 = vadd.xlane.f32.xlu0 %v606
        %v610 = vpop.xlane.xlu0 %609
        %v611 = vsub.f32 0.0, %v598
        %v612 = vsub.f32 0.0, %v600
        %v613 = vmul.f32 %v611, 1.442695
        %v614 = vpow.pop %v613
        %v615 = vmul.f32 %v612, 1.442695
        %v616 = vpow.pop %v615
        %v617 = vmul.f32 %v614, 120.0
        %v618 = vmul.f32 %v616, 120.0
        %v619 = vsub.f32 %v608, %v617
        %v620 = vsub.f32 %v610, %v618
        %621 = vmatprep.subr.mxu0 0.0
        %622 = vmatpush1.msra.mxu0 %v499
        %623 = vmatprep.subr.mxu0 0.0
        %624 = vmatpush1.msra.mxu0 %v500
        %625 = vmatprep.subr.mxu0 0.0
        %626 = vmatpush1.msra.mxu0 %v501
        %627 = vmatprep.subr.mxu0 0.0
        %628 = vmatpush1.msra.mxu0 %v502
        %629 = vmatprep.subr.mxu0 0.0
        %630 = vmatpush1.msra.mxu0 %v503
        %631 = vmatprep.subr.mxu0 0.0
        %632 = vmatpush1.msra.mxu0 %v504
        %633 = vmatprep.subr.mxu0 0.0
        %634 = vmatpush1.msra.mxu0 %v505
        %635 = vmatprep.subr.mxu0 0.0
        %636 = vmatpush1.msra.mxu0 %v506
        %637 = vmatprep.subr.mxu0 0.0
        %638 = vmatpush1.msra.mxu0 %v507
        %639 = vmatprep.subr.mxu0 0.0
        %640 = vmatpush1.msra.mxu0 %v508
        %641 = vmatprep.subr.mxu0 0.0
        %642 = vmatpush1.msra.mxu0 %v509
        %643 = vmatprep.subr.mxu0 0.0
        %644 = vmatpush1.msra.mxu0 %v510
        %645 = vmatprep.subr.mxu0 0.0
        %646 = vmatpush1.msra.mxu0 %v511
        %647 = vmatprep.subr.mxu0 0.0
        %648 = vmatpush1.msra.mxu0 %v512
        %649 = vmatprep.subr.mxu0 0.0
        %650 = vmatpush1.msra.mxu0 %v513
        %651 = vmatprep.subr.mxu0 0.0
        %652 = vmatpush1.msra.mxu0 %v514
        %653 = vmatprep.subr.mxu0 0.0
        %654 = vmatpush1.msra.mxu0 0.0
        %655 = vmatprep.subr.mxu0 0.0
        %656 = vmatpush1.msra.mxu0 0.0
        %657 = vmatprep.subr.mxu0 0.0
        %658 = vmatpush1.msra.mxu0 0.0
        %659 = vmatprep.subr.mxu0 0.0
        %660 = vmatpush1.msra.mxu0 0.0
        %661 = vmatprep.subr.mxu0 0.0
        %662 = vmatpush1.msra.mxu0 0.0
        %663 = vmatprep.subr.mxu0 0.0
        %664 = vmatpush1.msra.mxu0 0.0
        %665 = vmatprep.subr.mxu0 0.0
        %666 = vmatpush1.msra.mxu0 0.0
        %667 = vmatprep.subr.mxu0 0.0
        %668 = vmatpush1.msra.mxu0 0.0
        %669 = vmatprep.subr.mxu0 0.0
        %670 = vmatpush1.msra.mxu0 0.0
        %671 = vmatprep.subr.mxu0 0.0
        %672 = vmatpush1.msra.mxu0 0.0
        %673 = vmatprep.subr.mxu0 0.0
        %674 = vmatpush1.msra.mxu0 0.0
        %675 = vmatprep.subr.mxu0 0.0
        %676 = vmatpush1.msra.mxu0 0.0
        %677 = vmatprep.subr.mxu0 0.0
        %678 = vmatpush1.msra.mxu0 0.0
        %679 = vmatprep.subr.mxu0 0.0
        %680 = vmatpush1.msra.mxu0 0.0
        %681 = vmatprep.subr.mxu0 0.0
        %682 = vmatpush1.msra.mxu0 0.0
        %683 = vmatprep.subr.mxu0 0.0
        %684 = vmatpush1.msra.mxu0 0.0
        %685 = vmatprep.mubr.f32.mxu0 0.0
        %686 = vmatmul.mubr.f32.gmra.mrb[0].mxu0 %v604
        %v687 = vpop.f32.mrb[0].mxu0
        %v688 = vadd.f32 0.0, %v687
        %v689 = vpop.f32.mrb[0].mxu0
        %690 = vmatprep.mubr.f32.mxu0 0.0
        %691 = vmatmul.mubr.f32.gmra.mrb[0].mxu0 %v606
        %v692 = vpop.f32.mrb[0].mxu0
        %v693 = vadd.f32 0.0, %v692
        %v694 = vpop.f32.mrb[0].mxu0
        %695 = vdwg.mxu0
        %v696 = vrcp.pop %v619
        %v697 = vrcp.pop %v620
        %v698 = vmul.f32 %v688, %v696
        %v699 = vmul.f32 %v693, %v697
        %v700 = vld [vmem:[#allocation10] sm:$0xff]
        %v701 = vld [vmem:[#allocation10 + $0x8] sm:$0xff]
        %s702 = scalar_lea.vmem %s347, 16 [#allocation5]
        %v703 = vld [vmem:[%s702] sm:$0xff]
        %v704 = vld [vmem:[%s702 + $0x8] sm:$0xff]
        %s705 = scalar_lea.vmem %s356, 128 [#allocation7]
        %v706 = vld [vmem:[%s705] sm:$0xff]
        %v707 = vld [vmem:[%s705 + $0x8] sm:$0xff]
        %v708 = vld [vmem:[%s705 + $0x10] sm:$0xff]
        %v709 = vld [vmem:[%s705 + $0x18] sm:$0xff]
        %v710 = vld [vmem:[%s705 + $0x20] sm:$0xff]
        %v711 = vld [vmem:[%s705 + $0x28] sm:$0xff]
        %v712 = vld [vmem:[%s705 + $0x30] sm:$0xff]
        %v713 = vld [vmem:[%s705 + $0x38] sm:$0xff]
        %v714 = vld [vmem:[%s705 + $0x40] sm:$0xff]
        %v715 = vld [vmem:[%s705 + $0x48] sm:$0xff]
        %v716 = vld [vmem:[%s705 + $0x50] sm:$0xff]
        %v717 = vld [vmem:[%s705 + $0x58] sm:$0xff]
        %v718 = vld [vmem:[%s705 + $0x60] sm:$0xff]
        %v719 = vld [vmem:[%s705 + $0x68] sm:$0xff]
        %v720 = vld [vmem:[%s705 + $0x70] sm:$0xff]
        %v721 = vld [vmem:[%s705 + $0x78] sm:$0xff]
        %722 = vrot.lane.b32.xlu0 %v489, 112
        %v723 = vpop.permute.xlu0 %722
        %724 = vrot.lane.b32.xlu0 %v494, 112
        %v725 = vpop.permute.xlu0 %724
        %v726 = vsel %vm515, %v723, 0
        %v728 = vsel %vm515, %v725, 0
        %730 = vmatprep.subr.mxu0 0.0
        %731 = vmatpush1.msra.mxu0 %v703
        %732 = vmatprep.subr.mxu0 0.0
        %733 = vmatpush1.msra.mxu0 %v704
        %734 = vmatprep.subr.mxu0 0.0
        %735 = vmatpush1.msra.mxu0 0.0
        %736 = vmatprep.subr.mxu0 0.0
        %737 = vmatpush1.msra.mxu0 0.0
        %738 = vmatprep.subr.mxu0 0.0
        %739 = vmatpush1.msra.mxu0 0.0
        %740 = vmatprep.subr.mxu0 0.0
        %741 = vmatpush1.msra.mxu0 0.0
        %742 = vmatprep.subr.mxu0 0.0
        %743 = vmatpush1.msra.mxu0 0.0
        %744 = vmatprep.subr.mxu0 0.0
        %745 = vmatpush1.msra.mxu0 0.0
        %746 = vmatprep.subr.mxu0 0.0
        %747 = vmatpush1.msra.mxu0 0.0
        %748 = vmatprep.subr.mxu0 0.0
        %749 = vmatpush1.msra.mxu0 0.0
        %750 = vmatprep.subr.mxu0 0.0
        %751 = vmatpush1.msra.mxu0 0.0
        %752 = vmatprep.subr.mxu0 0.0
        %753 = vmatpush1.msra.mxu0 0.0
        %754 = vmatprep.subr.mxu0 0.0
        %755 = vmatpush1.msra.mxu0 0.0
        %756 = vmatprep.subr.mxu0 0.0
        %757 = vmatpush1.msra.mxu0 0.0
        %758 = vmatprep.subr.mxu0 0.0
        %759 = vmatpush1.msra.mxu0 0.0
        %760 = vmatprep.subr.mxu0 0.0
        %761 = vmatpush1.msra.mxu0 0.0
        %762 = vmatprep.subr.mxu0 0.0
        %763 = vmatpush1.msra.mxu0 0.0
        %764 = vmatprep.subr.mxu0 0.0
        %765 = vmatpush1.msra.mxu0 0.0
        %766 = vmatprep.subr.mxu0 0.0
        %767 = vmatpush1.msra.mxu0 0.0
        %768 = vmatprep.subr.mxu0 0.0
        %769 = vmatpush1.msra.mxu0 0.0
        %770 = vmatprep.subr.mxu0 0.0
        %771 = vmatpush1.msra.mxu0 0.0
        %772 = vmatprep.subr.mxu0 0.0
        %773 = vmatpush1.msra.mxu0 0.0
        %774 = vmatprep.subr.mxu0 0.0
        %775 = vmatpush1.msra.mxu0 0.0
        %776 = vmatprep.subr.mxu0 0.0
        %777 = vmatpush1.msra.mxu0 0.0
        %778 = vmatprep.subr.mxu0 0.0
        %779 = vmatpush1.msra.mxu0 0.0
        %780 = vmatprep.subr.mxu0 0.0
        %781 = vmatpush1.msra.mxu0 0.0
        %782 = vmatprep.subr.mxu0 0.0
        %783 = vmatpush1.msra.mxu0 0.0
        %784 = vmatprep.subr.mxu0 0.0
        %785 = vmatpush1.msra.mxu0 0.0
        %786 = vmatprep.subr.mxu0 0.0
        %787 = vmatpush1.msra.mxu0 0.0
        %788 = vmatprep.subr.mxu0 0.0
        %789 = vmatpush1.msra.mxu0 0.0
        %790 = vmatprep.subr.mxu0 0.0
        %791 = vmatpush1.msra.mxu0 0.0
        %792 = vmatprep.subr.mxu0 0.0
        %793 = vmatpush1.msra.mxu0 0.0
        %794 = vmatprep.mubr.f32.mxu0 0.0
        %795 = vmatmul.mubr.f32.gmra.mrb[0].mxu0 %v726
        %v796 = vpop.f32.mrb[0].mxu0
        %v797 = vadd.f32 0.0, %v796
        %v798 = vpop.f32.mrb[0].mxu0
        %799 = vmatprep.mubr.f32.mxu0 0.0
        %800 = vmatmul.mubr.f32.gmra.mrb[0].mxu0 %v728
        %v801 = vpop.f32.mrb[0].mxu0
        %v802 = vadd.f32 0.0, %v801
        %v803 = vpop.f32.mrb[0].mxu0
        %804 = vdwg.mxu0
        %805 = vmax.xlane.f32.xlu0 %v797
        %v806 = vpop.xlane.xlu0 %805
        %807 = vmax.xlane.f32.xlu0 %v802
        %v808 = vpop.xlane.xlu0 %807
        %v809 = vsub.f32 %v797, %v806
        %v810 = vsub.f32 %v802, %v808
        %v811 = vmul.f32 %v809, 1.442695
        %v812 = vpow.pop %v811
        %v813 = vmul.f32 %v810, 1.442695
        %v814 = vpow.pop %v813
        %815 = vadd.xlane.f32.xlu0 %v812
        %v816 = vpop.xlane.xlu0 %815
        %817 = vadd.xlane.f32.xlu0 %v814
        %v818 = vpop.xlane.xlu0 %817
        %v819 = vsub.f32 0.0, %v806
        %v820 = vsub.f32 0.0, %v808
        %v821 = vmul.f32 %v819, 1.442695
        %v822 = vpow.pop %v821
        %v823 = vmul.f32 %v820, 1.442695
        %v824 = vpow.pop %v823
        %v825 = vmul.f32 %v822, 120.0
        %v826 = vmul.f32 %v824, 120.0
        %v827 = vsub.f32 %v816, %v825
        %v828 = vsub.f32 %v818, %v826
        %829 = vmatprep.subr.mxu0 0.0
        %830 = vmatpush1.msra.mxu0 %v706
        %831 = vmatprep.subr.mxu0 0.0
        %832 = vmatpush1.msra.mxu0 %v707
        %833 = vmatprep.subr.mxu0 0.0
        %834 = vmatpush1.msra.mxu0 %v708
        %835 = vmatprep.subr.mxu0 0.0
        %836 = vmatpush1.msra.mxu0 %v709
        %837 = vmatprep.subr.mxu0 0.0
        %838 = vmatpush1.msra.mxu0 %v710
        %839 = vmatprep.subr.mxu0 0.0
        %840 = vmatpush1.msra.mxu0 %v711
        %841 = vmatprep.subr.mxu0 0.0
        %842 = vmatpush1.msra.mxu0 %v712
        %843 = vmatprep.subr.mxu0 0.0
        %844 = vmatpush1.msra.mxu0 %v713
        %845 = vmatprep.subr.mxu0 0.0
        %846 = vmatpush1.msra.mxu0 %v714
        %847 = vmatprep.subr.mxu0 0.0
        %848 = vmatpush1.msra.mxu0 %v715
        %849 = vmatprep.subr.mxu0 0.0
        %850 = vmatpush1.msra.mxu0 %v716
        %851 = vmatprep.subr.mxu0 0.0
        %852 = vmatpush1.msra.mxu0 %v717
        %853 = vmatprep.subr.mxu0 0.0
        %854 = vmatpush1.msra.mxu0 %v718
        %855 = vmatprep.subr.mxu0 0.0
        %856 = vmatpush1.msra.mxu0 %v719
        %857 = vmatprep.subr.mxu0 0.0
        %858 = vmatpush1.msra.mxu0 %v720
        %859 = vmatprep.subr.mxu0 0.0
        %860 = vmatpush1.msra.mxu0 %v721
        %861 = vmatprep.subr.mxu0 0.0
        %862 = vmatpush1.msra.mxu0 0.0
        %863 = vmatprep.subr.mxu0 0.0
        %864 = vmatpush1.msra.mxu0 0.0
        %865 = vmatprep.subr.mxu0 0.0
        %866 = vmatpush1.msra.mxu0 0.0
        %867 = vmatprep.subr.mxu0 0.0
        %868 = vmatpush1.msra.mxu0 0.0
        %869 = vmatprep.subr.mxu0 0.0
        %870 = vmatpush1.msra.mxu0 0.0
        %871 = vmatprep.subr.mxu0 0.0
        %872 = vmatpush1.msra.mxu0 0.0
        %873 = vmatprep.subr.mxu0 0.0
        %874 = vmatpush1.msra.mxu0 0.0
        %875 = vmatprep.subr.mxu0 0.0
        %876 = vmatpush1.msra.mxu0 0.0
        %877 = vmatprep.subr.mxu0 0.0
        %878 = vmatpush1.msra.mxu0 0.0
        %879 = vmatprep.subr.mxu0 0.0
        %880 = vmatpush1.msra.mxu0 0.0
        %881 = vmatprep.subr.mxu0 0.0
        %882 = vmatpush1.msra.mxu0 0.0
        %883 = vmatprep.subr.mxu0 0.0
        %884 = vmatpush1.msra.mxu0 0.0
        %885 = vmatprep.subr.mxu0 0.0
        %886 = vmatpush1.msra.mxu0 0.0
        %887 = vmatprep.subr.mxu0 0.0
        %888 = vmatpush1.msra.mxu0 0.0
        %889 = vmatprep.subr.mxu0 0.0
        %890 = vmatpush1.msra.mxu0 0.0
        %891 = vmatprep.subr.mxu0 0.0
        %892 = vmatpush1.msra.mxu0 0.0
        %893 = vmatprep.mubr.f32.mxu0 0.0
        %894 = vmatmul.mubr.f32.gmra.mrb[0].mxu0 %v812
        %v895 = vpop.f32.mrb[0].mxu0
        %v896 = vadd.f32 0.0, %v895
        %v897 = vpop.f32.mrb[0].mxu0
        %898 = vmatprep.mubr.f32.mxu0 0.0
        %899 = vmatmul.mubr.f32.gmra.mrb[0].mxu0 %v814
        %v900 = vpop.f32.mrb[0].mxu0
        %v901 = vadd.f32 0.0, %v900
        %v902 = vpop.f32.mrb[0].mxu0
        %903 = vdwg.mxu0
        %v904 = vrcp.pop %v827
        %v905 = vrcp.pop %v828
        %v906 = vmul.f32 %v896, %v904
        %v907 = vmul.f32 %v901, %v905
        %s908 = scalar_lea.vmem [#allocation10], 16
        %v909 = vld [vmem:[%s908] sm:$0xff]
        %v910 = vld [vmem:[%s908 + $0x8] sm:$0xff]
        %v912 = vsel %vm515, %v906, 0
        %v915 = vsel %vm515, %v907, 0
        %917 = vmatprep.subr.mxu0 0.0
        %918 = vmatpush1.msra.mxu0 %v909
        %919 = vmatprep.subr.mxu0 0.0
        %920 = vmatpush1.msra.mxu0 %v910
        %921 = vmatprep.subr.mxu0 0.0
        %922 = vmatpush1.msra.mxu0 0.0
        %923 = vmatprep.subr.mxu0 0.0
        %924 = vmatpush1.msra.mxu0 0.0
        %925 = vmatprep.subr.mxu0 0.0
        %926 = vmatpush1.msra.mxu0 0.0
        %927 = vmatprep.subr.mxu0 0.0
        %928 = vmatpush1.msra.mxu0 0.0
        %929 = vmatprep.subr.mxu0 0.0
        %930 = vmatpush1.msra.mxu0 0.0
        %931 = vmatprep.subr.mxu0 0.0
        %932 = vmatpush1.msra.mxu0 0.0
        %933 = vmatprep.subr.mxu0 0.0
        %934 = vmatpush1.msra.mxu0 0.0
        %935 = vmatprep.subr.mxu0 0.0
        %936 = vmatpush1.msra.mxu0 0.0
        %937 = vmatprep.subr.mxu0 0.0
        %938 = vmatpush1.msra.mxu0 0.0
        %939 = vmatprep.subr.mxu0 0.0
        %940 = vmatpush1.msra.mxu0 0.0
        %941 = vmatprep.subr.mxu0 0.0
        %942 = vmatpush1.msra.mxu0 0.0
        %943 = vmatprep.subr.mxu0 0.0
        %944 = vmatpush1.msra.mxu0 0.0
        %945 = vmatprep.subr.mxu0 0.0
        %946 = vmatpush1.msra.mxu0 0.0
        %947 = vmatprep.subr.mxu0 0.0
        %948 = vmatpush1.msra.mxu0 0.0
        %949 = vmatprep.subr.mxu0 0.0
        %950 = vmatpush1.msra.mxu0 0.0
        %951 = vmatprep.subr.mxu0 0.0
        %952 = vmatpush1.msra.mxu0 0.0
        %953 = vmatprep.subr.mxu0 0.0
        %954 = vmatpush1.msra.mxu0 0.0
        %955 = vmatprep.subr.mxu0 0.0
        %956 = vmatpush1.msra.mxu0 0.0
        %957 = vmatprep.subr.mxu0 0.0
        %958 = vmatpush1.msra.mxu0 0.0
        %959 = vmatprep.subr.mxu0 0.0
        %960 = vmatpush1.msra.mxu0 0.0
        %961 = vmatprep.subr.mxu0 0.0
        %962 = vmatpush1.msra.mxu0 0.0
        %963 = vmatprep.subr.mxu0 0.0
        %964 = vmatpush1.msra.mxu0 0.0
        %965 = vmatprep.subr.mxu0 0.0
        %966 = vmatpush1.msra.mxu0 0.0
        %967 = vmatprep.subr.mxu0 0.0
        %968 = vmatpush1.msra.mxu0 0.0
        %969 = vmatprep.subr.mxu0 0.0
        %970 = vmatpush1.msra.mxu0 0.0
        %971 = vmatprep.subr.mxu0 0.0
        %972 = vmatpush1.msra.mxu0 0.0
        %973 = vmatprep.subr.mxu0 0.0
        %974 = vmatpush1.msra.mxu0 0.0
        %975 = vmatprep.subr.mxu0 0.0
        %976 = vmatpush1.msra.mxu0 0.0
        %977 = vmatprep.subr.mxu0 0.0
        %978 = vmatpush1.msra.mxu0 0.0
        %979 = vmatprep.subr.mxu0 0.0
        %980 = vmatpush1.msra.mxu0 0.0
        %981 = vmatprep.mubr.f32.mxu0 0.0
        %982 = vmatmul.mubr.f32.gmra.mrb[0].mxu0 %v912
        %v983 = vpop.f32.mrb[0].mxu0
        %v984 = vadd.f32 0.0, %v983
        %v985 = vpop.f32.mrb[0].mxu0
        %986 = vmatprep.mubr.f32.mxu0 0.0
        %987 = vmatmul.mubr.f32.gmra.mrb[0].mxu0 %v915
        %v988 = vpop.f32.mrb[0].mxu0
        %v989 = vadd.f32 0.0, %v988
        %v990 = vpop.f32.mrb[0].mxu0
        %991 = vdwg.mxu0
        %v993 = vsel %vm515, %v698, 0
        %v996 = vsel %vm515, %v699, 0
        %998 = vmatprep.subr.mxu0 0.0
        %999 = vmatpush1.msra.mxu0 %v700
        %1000 = vmatprep.subr.mxu0 0.0
        %1001 = vmatpush1.msra.mxu0 %v701
        %1002 = vmatprep.subr.mxu0 0.0
        %1003 = vmatpush1.msra.mxu0 0.0
        %1004 = vmatprep.subr.mxu0 0.0
        %1005 = vmatpush1.msra.mxu0 0.0
        %1006 = vmatprep.subr.mxu0 0.0
        %1007 = vmatpush1.msra.mxu0 0.0
        %1008 = vmatprep.subr.mxu0 0.0
        %1009 = vmatpush1.msra.mxu0 0.0
        %1010 = vmatprep.subr.mxu0 0.0
        %1011 = vmatpush1.msra.mxu0 0.0
        %1012 = vmatprep.subr.mxu0 0.0
        %1013 = vmatpush1.msra.mxu0 0.0
        %1014 = vmatprep.subr.mxu0 0.0
        %1015 = vmatpush1.msra.mxu0 0.0
        %1016 = vmatprep.subr.mxu0 0.0
        %1017 = vmatpush1.msra.mxu0 0.0
        %1018 = vmatprep.subr.mxu0 0.0
        %1019 = vmatpush1.msra.mxu0 0.0
        %1020 = vmatprep.subr.mxu0 0.0
        %1021 = vmatpush1.msra.mxu0 0.0
        %1022 = vmatprep.subr.mxu0 0.0
        %1023 = vmatpush1.msra.mxu0 0.0
        %1024 = vmatprep.subr.mxu0 0.0
        %1025 = vmatpush1.msra.mxu0 0.0
        %1026 = vmatprep.subr.mxu0 0.0
        %1027 = vmatpush1.msra.mxu0 0.0
        %1028 = vmatprep.subr.mxu0 0.0
        %1029 = vmatpush1.msra.mxu0 0.0
        %1030 = vmatprep.subr.mxu0 0.0
        %1031 = vmatpush1.msra.mxu0 0.0
        %1032 = vmatprep.subr.mxu0 0.0
        %1033 = vmatpush1.msra.mxu0 0.0
        %1034 = vmatprep.subr.mxu0 0.0
        %1035 = vmatpush1.msra.mxu0 0.0
        %1036 = vmatprep.subr.mxu0 0.0
        %1037 = vmatpush1.msra.mxu0 0.0
        %1038 = vmatprep.subr.mxu0 0.0
        %1039 = vmatpush1.msra.mxu0 0.0
        %1040 = vmatprep.subr.mxu0 0.0
        %1041 = vmatpush1.msra.mxu0 0.0
        %1042 = vmatprep.subr.mxu0 0.0
        %1043 = vmatpush1.msra.mxu0 0.0
        %1044 = vmatprep.subr.mxu0 0.0
        %1045 = vmatpush1.msra.mxu0 0.0
        %1046 = vmatprep.subr.mxu0 0.0
        %1047 = vmatpush1.msra.mxu0 0.0
        %1048 = vmatprep.subr.mxu0 0.0
        %1049 = vmatpush1.msra.mxu0 0.0
        %1050 = vmatprep.subr.mxu0 0.0
        %1051 = vmatpush1.msra.mxu0 0.0
        %1052 = vmatprep.subr.mxu0 0.0
        %1053 = vmatpush1.msra.mxu0 0.0
        %1054 = vmatprep.subr.mxu0 0.0
        %1055 = vmatpush1.msra.mxu0 0.0
        %1056 = vmatprep.subr.mxu0 0.0
        %1057 = vmatpush1.msra.mxu0 0.0
        %1058 = vmatprep.subr.mxu0 0.0
        %1059 = vmatpush1.msra.mxu0 0.0
        %1060 = vmatprep.subr.mxu0 0.0
        %1061 = vmatpush1.msra.mxu0 0.0
        %1062 = vmatprep.mubr.f32.mxu0 0.0
        %1063 = vmatmul.mubr.f32.gmra.mrb[0].mxu0 %v993
        %v1064 = vpop.f32.mrb[0].mxu0
        %v1065 = vadd.f32 %v984, %v1064
        %v1066 = vpop.f32.mrb[0].mxu0
        %1067 = vmatprep.mubr.f32.mxu0 0.0
        %1068 = vmatmul.mubr.f32.gmra.mrb[0].mxu0 %v996
        %v1069 = vpop.f32.mrb[0].mxu0
        %v1070 = vadd.f32 %v989, %v1069
        %v1071 = vpop.f32.mrb[0].mxu0
        %1072 = vdwg.mxu0
        %v1073 = vld [vmem:[#allocation11] sm:$0x1]
        %v1075 = vlaneseq
        %v1076 = vshrl.u32 %v1075, 7
        %v1077 = vsub.s32 0, %v1076
        %v1078 = vrot.slane %v1073, %v1077
        %v1080 = vadd.f32 %v1065, %v1078
        %v1081 = vadd.f32 %v1070, %v1078
        %1082 = vst.msk [vmem:[%s406] sm:$0xff] %vm415, %v1080
        %1083 = vst.msk [vmem:[%s406 + $0x8] sm:$0xff] %vm415, %v1081
        %s1084 = sand.u32 %s193, 1
        %s1085 = scalar_lea.sflag [#allocation4], %s1084
        %s1086 = sand.u32 %s193, 1
        %s1087 = smul.addr %s1086, 16
        %s1088 = scalar_lea.vmem [#allocation13], %s1087
        // Predicated region
        $region69: #{tpu_custom_call.1} parent=43 // pred_check
          %p1089 = pneg %p203
        $region70: #{tpu_custom_call.1} parent=43 // pred_check_branch
          %1091 = sbr.rel (%p1089) target = $region72
        $region71: #{tpu_custom_call.1} parent=43 // pred_region
          %s1092 = smul.u32 2, %s33
          %s1094 = ssub.s32 256, 256
          %1095 = vsyncadd %s1085, %s1094
          %s1096 = smul.addr %s32, 2
          %s1097 = sadd.s32 %s1092, %s1096
          %s1098 = smul.addr %s1097, 128
          %s1099 = scalar_lea.hbm %s6, %s1098
          %s1100 = sshll.u32 %s1088, 4
          %s1101 = int_to_ptr.vmem [resolvable:$true] %s1100
          %1106 = dma.vmem_to_hbm [thread:$0]  %s1101, 256, %s1099, %s1085, 128, 128, 8
        $region72: #{tpu_custom_call.1} parent=43 // pred_fallthru
          _
      $region44: #{tpu_custom_call.1} parent=5 // pred_fallthru
        _
      %p1107 = scmp.le.s32.totalorder 2, %s23
      // Predicated region
      $region73: #{tpu_custom_call.1} parent=5 // pred_check
        %p1108 = pneg %p1107
      $region74: #{tpu_custom_call.1} parent=5 // pred_check_branch
        %1110 = sbr.rel (%p1108) target = $region76
      $region75: #{tpu_custom_call.1} parent=5 // pred_region
        %s1111 = ssub.s32 %s23, 2
        // Predicated region
        $region77: #{tpu_custom_call.1} parent=75 // pred_check
          %p1112 = pneg %p209
        $region78: #{tpu_custom_call.1} parent=75 // pred_check_branch
          %1114 = sbr.rel (%p1112) target = $region80
        $region79: #{tpu_custom_call.1} parent=75 // pred_region
          %s1115 = sand.u32 %s194, 1
          %s1116 = scalar_lea.sflag [#allocation4], %s1115
          %s1117 = sand.u32 %s194, 1
          %s1118 = smul.addr %s1117, 16
          %s1119 = scalar_lea.vmem [#allocation13], %s1118
          %1120 = dma.done %s1116, 256
        $region80: #{tpu_custom_call.1} parent=75 // pred_fallthru
          _
      $region76: #{tpu_custom_call.1} parent=5 // pred_fallthru
        _
    $region6: #{tpu_custom_call.1} parent=1 // loop_footer
      %s27 = sadd.s32 1, %s23
    $region7: #{tpu_custom_call.1} parent=1 // loop_footer_branch
      %22 = sbr.rel target = $region3
    $region8: #{tpu_custom_call.1} parent=1 // loop_exit
      _
    %1121 = vsyncpa [#allocation3], 1
    %s1122 = scalar_lea.sflag [#allocation3], 1
    %1123 = vsyncpa %s1122, 1
    %1124 = vsyncpa [#allocation6], 1
    %s1125 = scalar_lea.sflag [#allocation6], 1
    %1126 = vsyncpa %s1125, 1
    %1127 = vsyncpa [#allocation9], 1
    %1128 = vsyncpa [#allocation12], 1
    %1129 = vsyncpa [#allocation4], 1
    %s1130 = scalar_lea.sflag [#allocation4], 1
    %1131 = vsyncpa %s1130, 1

</llo_original>
